<compile_context>
chip_gen: v7x
topology: tpu7x:2x2x1
jax: 0.10.0
libtpu: 0.0.40
codegen_flags: <defaults>
</compile_context>

<pallas_src>
import jax
import jax.numpy as jnp
from jax import lax
from jax.experimental import pallas as pl
from jax.experimental.pallas import tpu as pltpu

NDF = 64           # first conv width
EPS = 1e-5         # BatchNorm2d eps (PyTorch default)
NEG_SLOPE = 0.2    # LeakyReLU negative slope


def _leaky(x):
    return jnp.where(x > 0, x, NEG_SLOPE * x)


def _pick_tile(hw, max_tile=2048):
    """Largest 128-multiple tile (<= max_tile) dividing H*W; fall back to full H*W."""
    for t in (max_tile, 1024, 512, 256, 128):
        if t <= hw and hw % t == 0:
            return t
    return hw


def _make_kernel(n_batch, hw):
    inv_total = 1.0 / float(n_batch * hw)   # BN statistics are over N*H*W pixels
    inv_hw = 1.0 / float(hw)                # per-sample spatial mean

    def kernel(x1_ref, x2_ref, w1a_ref, w1b_ref, b1_ref, w2_ref,
               gamma_ref, beta_ref, w3_ref, out_ref,
               sum_ref, sq_ref, scale_ref, shift_ref):
        phase = pl.program_id(0)
        n = pl.program_id(1)
        t = pl.program_id(2)
        last_n = pl.num_programs(1) - 1
        last_t = pl.num_programs(2) - 1

        @pl.when((phase == 0) & (n == 0) & (t == 0))
        def _init():
            sum_ref[...] = jnp.zeros_like(sum_ref)
            sq_ref[...] = jnp.zeros_like(sq_ref)
            out_ref[...] = jnp.zeros_like(out_ref)

        # ---- shared recompute: conv1(+bias) + LeakyReLU + conv2 (bf16 MXU, f32 acc) ----
        x1 = x1_ref[...].astype(jnp.bfloat16)                       # (Cin, TILE)
        x2 = x2_ref[...].astype(jnp.bfloat16)
        h1 = (jnp.dot(w1a_ref[...], x1, preferred_element_type=jnp.float32)
              + jnp.dot(w1b_ref[...], x2, preferred_element_type=jnp.float32)
              + b1_ref[...])                                        # (64, TILE) f32
        h1 = _leaky(h1).astype(jnp.bfloat16)
        h2 = jnp.dot(w2_ref[...], h1, preferred_element_type=jnp.float32)  # (128, TILE) f32

        @pl.when(phase == 0)
        def _stats():
            sum_ref[...] += jnp.sum(h2, axis=1, keepdims=True)      # (128, 1)
            sq_ref[...] += jnp.sum(h2 * h2, axis=1, keepdims=True)

        @pl.when((phase == 0) & (n == last_n) & (t == last_t))
        def _fold_bn():
            mu = sum_ref[...] * inv_total
            var = jnp.maximum(sq_ref[...] * inv_total - mu * mu, 0.0)
            scale = gamma_ref[...] * lax.rsqrt(var + EPS)
            scale_ref[...] = scale
            shift_ref[...] = beta_ref[...] - mu * scale

        @pl.when(phase == 1)
        def _apply():
            hn = _leaky(h2 * scale_ref[...] + shift_ref[...])       # (128, TILE)
            # conv3 (128 -> 1, no bias): broadcast-multiply + sublane reduce.
            logits = jnp.sum(hn * w3_ref[...], axis=0, keepdims=True)  # (1, TILE)
            y = jax.nn.sigmoid(logits)
            tile_mean = jnp.sum(y) * inv_hw
            rows = lax.broadcasted_iota(jnp.int32, out_ref.shape, 0)
            out_ref[...] += jnp.where(rows == n, tile_mean, 0.0)

    return kernel


def make_params(key, in_each=3, ndf=NDF, dtype=jnp.float32):
    """Parameters in matmul form (out_ch, in_ch); conv3 has no bias (bias=False)."""
    k1a, k1b, kb1, k2, k3 = jax.random.split(key, 5)
    w1a = jax.random.normal(k1a, (ndf, in_each), dtype) * 0.05
    w1b = jax.random.normal(k1b, (ndf, in_each), dtype) * 0.05
    b1 = jax.random.normal(kb1, (ndf, 1), dtype) * 0.05
    w2 = jax.random.normal(k2, (2 * ndf, ndf), dtype) * 0.05
    gamma = jnp.ones((2 * ndf, 1), dtype)    # BatchNorm2d default affine init
    beta = jnp.zeros((2 * ndf, 1), dtype)
    w3 = jax.random.normal(k3, (2 * ndf, 1), dtype) * 0.05
    return w1a, w1b, b1, w2, gamma, beta, w3


def pixel_discriminator(input1, input2, params):
    """input1, input2: NCHW float arrays with 3 channels each. Returns shape (N,)."""
    w1a, w1b, b1, w2, gamma, beta, w3 = params
    N, C, H, W = input1.shape
    assert input2.shape == input1.shape
    HW = H * W
    tile = _pick_tile(HW)
    n_tiles = HW // tile

    # Free reshape only (contiguous NCHW -> (N, C, H*W)); no concat / transpose.
    x1 = input1.reshape(N, C, HW).astype(jnp.float32)
    x2 = input2.reshape(N, C, HW).astype(jnp.float32)

    # bf16 matmul operands (tiny arrays; cast once in the wrapper).
    w1a_b = w1a.astype(jnp.bfloat16)
    w1b_b = w1b.astype(jnp.bfloat16)
    w2_b = w2.astype(jnp.bfloat16)

    ndf = w1a.shape[0]
    ndf2 = w2.shape[0]

    x_spec = pl.BlockSpec((None, C, tile), lambda p, n, t: (n, 0, t))

    def full2d(shape):
        return pl.BlockSpec(shape, lambda p, n, t: (0, 0))

    out = pl.pallas_call(
        _make_kernel(N, HW),
        out_shape=jax.ShapeDtypeStruct((N, 1), jnp.float32),
        grid=(2, N, n_tiles),                       # (phase, sample, pixel-tile)
        in_specs=[
            x_spec, x_spec,
            full2d((ndf, C)), full2d((ndf, C)), full2d((ndf, 1)),
            full2d((ndf2, ndf)), full2d((ndf2, 1)), full2d((ndf2, 1)),
            full2d((ndf2, 1)),
        ],
        out_specs=pl.BlockSpec((N, 1), lambda p, n, t: (0, 0)),
        scratch_shapes=[
            pltpu.VMEM((ndf2, 1), jnp.float32),     # channel sum
            pltpu.VMEM((ndf2, 1), jnp.float32),     # channel sum of squares
            pltpu.VMEM((ndf2, 1), jnp.float32),     # folded BN scale
            pltpu.VMEM((ndf2, 1), jnp.float32),     # folded BN shift
        ],
        compiler_params=pltpu.CompilerParams(
            dimension_semantics=("arbitrary", "arbitrary", "arbitrary")),
    )(x1, x2, w1a_b, w1b_b, b1, w2_b, gamma, beta, w3)
    return out[:, 0]


def _reference(input1, input2, params):
    """Pure-JAX f32 reference for sanity checking (matches the PyTorch module)."""
    w1a, w1b, b1, w2, gamma, beta, w3 = params
    N, C, H, W = input1.shape
    HW = H * W
    x1 = input1.reshape(N, C, HW)
    x2 = input2.reshape(N, C, HW)
    h1 = (jnp.einsum('oc,ncp->nop', w1a, x1)
          + jnp.einsum('oc,ncp->nop', w1b, x2) + b1[None])
    h1 = jnp.where(h1 > 0, h1, NEG_SLOPE * h1)
    h2 = jnp.einsum('oc,ncp->nop', w2, h1)
    mu = jnp.mean(h2, axis=(0, 2), keepdims=True)
    var = jnp.mean((h2 - mu) ** 2, axis=(0, 2), keepdims=True)
    hn = (h2 - mu) / jnp.sqrt(var + EPS) * gamma[None] + beta[None]
    hn = jnp.where(hn > 0, hn, NEG_SLOPE * hn)
    logits = jnp.einsum('ncp,co->nop', hn, w3)
    y = jax.nn.sigmoid(logits)
    return jnp.mean(y, axis=(1, 2))


if __name__ == "__main__":
    key = jax.random.PRNGKey(0)
    k_in1, k_in2, k_p = jax.random.split(key, 3)

    # Small deterministic example: batch=2, 3+3 input channels, 16x16 spatial.
    N, Cin_each, H, W = 2, 3, 16, 16
    input1 = jax.random.normal(k_in1, (N, Cin_each, H, W), jnp.float32)
    input2 = jax.random.normal(k_in2, (N, Cin_each, H, W), jnp.float32)
    params = make_params(k_p, in_each=Cin_each, ndf=NDF)

    out = pixel_discriminator(input1, input2, params)
    out = jax.block_until_ready(out)

    ref = _reference(input1, input2, params)
    assert out.shape == (N,), out.shape
    # Loose tolerance: kernel uses bf16 matmul operands (f32 accumulation),
    # reference is pure f32.
    assert jnp.allclose(out, ref, atol=2e-2, rtol=2e-2), (out, ref)
    print("KERNEL_OK")
</pallas_src>

<mosaic_0001>
module attributes {stable_mosaic.version = 11 : i64} {
  func.func @kernel(%arg0: i32, %arg1: i32, %arg2: i32, %arg3: memref<1x3x256xf32, #tpu.memory_space<vmem>>, %arg4: memref<1x3x256xf32, #tpu.memory_space<vmem>>, %arg5: memref<64x3xbf16, #tpu.memory_space<vmem>>, %arg6: memref<64x3xbf16, #tpu.memory_space<vmem>>, %arg7: memref<64x1xf32, #tpu.memory_space<vmem>>, %arg8: memref<128x64xbf16, #tpu.memory_space<vmem>>, %arg9: memref<128x1xf32, #tpu.memory_space<vmem>>, %arg10: memref<128x1xf32, #tpu.memory_space<vmem>>, %arg11: memref<128x1xf32, #tpu.memory_space<vmem>>, %arg12: memref<2x1xf32, #tpu.memory_space<vmem>>, %arg13: memref<128x1xf32, #tpu.memory_space<vmem>>, %arg14: memref<128x1xf32, #tpu.memory_space<vmem>>, %arg15: memref<128x1xf32, #tpu.memory_space<vmem>>, %arg16: memref<128x1xf32, #tpu.memory_space<vmem>>) attributes {dimension_semantics = [#tpu.dimension_semantics<arbitrary>, #tpu.dimension_semantics<arbitrary>, #tpu.dimension_semantics<arbitrary>], iteration_bounds = array<i64: 2, 2, 1>, scalar_prefetch = 0 : i64, scratch_operands = 4 : i64, tpu.core_type = #tpu.core_type<tc>, window_params = [{transform_indices = @transform_0, window_bounds = array<i64: 1, 3, 256>}, {transform_indices = @transform_1, window_bounds = array<i64: 1, 3, 256>}, {pipeline_mode = #tpu.pipeline_mode<synchronous>, transform_indices = @transform_2, window_bounds = array<i64: 64, 3>}, {pipeline_mode = #tpu.pipeline_mode<synchronous>, transform_indices = @transform_3, window_bounds = array<i64: 64, 3>}, {pipeline_mode = #tpu.pipeline_mode<synchronous>, transform_indices = @transform_4, window_bounds = array<i64: 64, 1>}, {pipeline_mode = #tpu.pipeline_mode<synchronous>, transform_indices = @transform_5, window_bounds = array<i64: 128, 64>}, {pipeline_mode = #tpu.pipeline_mode<synchronous>, transform_indices = @transform_6, window_bounds = array<i64: 128, 1>}, {pipeline_mode = #tpu.pipeline_mode<synchronous>, transform_indices = @transform_7, window_bounds = array<i64: 128, 1>}, {pipeline_mode = #tpu.pipeline_mode<synchronous>, transform_indices = @transform_8, window_bounds = array<i64: 128, 1>}, {pipeline_mode = #tpu.pipeline_mode<synchronous>, transform_indices = @transform_9, window_bounds = array<i64: 2, 1>}]} {
    %c0_i32 = arith.constant 0 : i32
    %0 = arith.cmpi eq, %arg0, %c0_i32 : i32
    %c0_i32_0 = arith.constant 0 : i32
    %1 = arith.cmpi eq, %arg1, %c0_i32_0 : i32
    %2 = arith.andi %0, %1 : i1
    %c0_i32_1 = arith.constant 0 : i32
    %3 = arith.cmpi eq, %arg2, %c0_i32_1 : i32
    %4 = arith.andi %2, %3 : i1
    %5 = arith.extui %4 : i1 to i32
    %c0_i32_2 = arith.constant 0 : i32
    %6 = arith.cmpi ne, %5, %c0_i32_2 : i32
    scf.if %6 {
      %cst_27 = arith.constant 0.000000e+00 : f32
      %42 = vector.broadcast %cst_27 : f32 to vector<128x1xf32>
      %c0_28 = arith.constant 0 : index
      %c0_29 = arith.constant 0 : index
      %43 = vector.load %arg13[%c0_28, %c0_29] : memref<128x1xf32, #tpu.memory_space<vmem>>, vector<128x1xf32>
      tpu.vector_store %arg13[%c0_28, %c0_29], %42 {strides = array<i32>} : memref<128x1xf32, #tpu.memory_space<vmem>>, vector<128x1xf32>,
      %cst_30 = arith.constant 0.000000e+00 : f32
      %44 = vector.broadcast %cst_30 : f32 to vector<128x1xf32>
      %c0_31 = arith.constant 0 : index
      %c0_32 = arith.constant 0 : index
      %45 = vector.load %arg14[%c0_31, %c0_32] : memref<128x1xf32, #tpu.memory_space<vmem>>, vector<128x1xf32>
      tpu.vector_store %arg14[%c0_31, %c0_32], %44 {strides = array<i32>} : memref<128x1xf32, #tpu.memory_space<vmem>>, vector<128x1xf32>,
      %cst_33 = arith.constant 0.000000e+00 : f32
      %46 = vector.broadcast %cst_33 : f32 to vector<2x1xf32>
      %c0_34 = arith.constant 0 : index
      %c0_35 = arith.constant 0 : index
      %47 = vector.load %arg12[%c0_34, %c0_35] : memref<2x1xf32, #tpu.memory_space<vmem>>, vector<2x1xf32>
      tpu.vector_store %arg12[%c0_34, %c0_35], %46 {strides = array<i32>} : memref<2x1xf32, #tpu.memory_space<vmem>>, vector<2x1xf32>,
    } else {
    }
    %c0 = arith.constant 0 : index
    %c0_3 = arith.constant 0 : index
    %c0_4 = arith.constant 0 : index
    %7 = vector.load %arg3[%c0, %c0_3, %c0_4] : memref<1x3x256xf32, #tpu.memory_space<vmem>>, vector<1x3x256xf32>
    %8 = vector.shape_cast %7 : vector<1x3x256xf32> to vector<3x256xf32>
    %9 = arith.truncf %8 : vector<3x256xf32> to vector<3x256xbf16>
    %c0_5 = arith.constant 0 : index
    %c0_6 = arith.constant 0 : index
    %c0_7 = arith.constant 0 : index
    %10 = vector.load %arg4[%c0_5, %c0_6, %c0_7] : memref<1x3x256xf32, #tpu.memory_space<vmem>>, vector<1x3x256xf32>
    %11 = vector.shape_cast %10 : vector<1x3x256xf32> to vector<3x256xf32>
    %12 = arith.truncf %11 : vector<3x256xf32> to vector<3x256xbf16>
    %c0_8 = arith.constant 0 : index
    %c0_9 = arith.constant 0 : index
    %13 = vector.load %arg5[%c0_8, %c0_9] : memref<64x3xbf16, #tpu.memory_space<vmem>>, vector<64x3xbf16>
    %cst = arith.constant dense<0.000000e+00> : vector<64x256xf32>
    %14 = tpu.matmul %13, %9, %cst {dimension_numbers = #tpu.dot_dimension_numbers<[1], [0], [0], [1], [0, 0, 1, 1], [], []>} : vector<64x3xbf16>, vector<3x256xbf16>, vector<64x256xf32> -> vector<64x256xf32>
    %c0_10 = arith.constant 0 : index
    %c0_11 = arith.constant 0 : index
    %15 = vector.load %arg6[%c0_10, %c0_11] : memref<64x3xbf16, #tpu.memory_space<vmem>>, vector<64x3xbf16>
    %cst_12 = arith.constant dense<0.000000e+00> : vector<64x256xf32>
    %16 = tpu.matmul %15, %12, %cst_12 {dimension_numbers = #tpu.dot_dimension_numbers<[1], [0], [0], [1], [0, 0, 1, 1], [], []>} : vector<64x3xbf16>, vector<3x256xbf16>, vector<64x256xf32> -> vector<64x256xf32>
    %17 = arith.addf %14, %16 : vector<64x256xf32>
    %c0_13 = arith.constant 0 : index
    %c0_14 = arith.constant 0 : index
    %18 = vector.load %arg7[%c0_13, %c0_14] : memref<64x1xf32, #tpu.memory_space<vmem>>, vector<64x1xf32>
    %19 = vector.broadcast %18 : vector<64x1xf32> to vector<64x256xf32>
    %20 = arith.addf %17, %19 : vector<64x256xf32>
    %cst_15 = arith.constant 0.000000e+00 : f32
    %21 = vector.broadcast %cst_15 : f32 to vector<64x256xf32>
    %22 = arith.cmpf ogt, %20, %21 : vector<64x256xf32>
    %cst_16 = arith.constant 2.000000e-01 : f32
    %23 = vector.broadcast %cst_16 : f32 to vector<64x256xf32>
    %24 = arith.mulf %23, %20 : vector<64x256xf32>
    %25 = arith.select %22, %20, %24 : vector<64x256xi1>, vector<64x256xf32>
    %26 = arith.truncf %25 : vector<64x256xf32> to vector<64x256xbf16>
    %c0_17 = arith.constant 0 : index
    %c0_18 = arith.constant 0 : index
    %27 = vector.load %arg8[%c0_17, %c0_18] : memref<128x64xbf16, #tpu.memory_space<vmem>>, vector<128x64xbf16>
    %cst_19 = arith.constant dense<0.000000e+00> : vector<128x256xf32>
    %28 = tpu.matmul %27, %26, %cst_19 {dimension_numbers = #tpu.dot_dimension_numbers<[1], [0], [0], [1], [0, 0, 1, 1], [], []>} : vector<128x64xbf16>, vector<64x256xbf16>, vector<128x256xf32> -> vector<128x256xf32>
    %c0_i32_20 = arith.constant 0 : i32
    %29 = arith.cmpi eq, %arg0, %c0_i32_20 : i32
    %30 = arith.extui %29 : i1 to i32
    %c0_i32_21 = arith.constant 0 : i32
    %31 = arith.cmpi ne, %30, %c0_i32_21 : i32
    scf.if %31 {
      %c0_27 = arith.constant 0 : index
      %c0_28 = arith.constant 0 : index
      %42 = vector.load %arg13[%c0_27, %c0_28] : memref<128x1xf32, #tpu.memory_space<vmem>>, vector<128x1xf32>
      %cst_29 = arith.constant dense<0.000000e+00> : vector<128xf32>
      %43 = vector.multi_reduction <add>, %28, %cst_29 [1] : vector<128x256xf32> to vector<128xf32>
      %44 = vector.shape_cast %43 : vector<128xf32> to vector<128x1xf32>
      %45 = arith.addf %42, %44 : vector<128x1xf32>
      %c0_30 = arith.constant 0 : index
      %c0_31 = arith.constant 0 : index
      %46 = vector.load %arg13[%c0_30, %c0_31] : memref<128x1xf32, #tpu.memory_space<vmem>>, vector<128x1xf32>
      tpu.vector_store %arg13[%c0_30, %c0_31], %45 {strides = array<i32>} : memref<128x1xf32, #tpu.memory_space<vmem>>, vector<128x1xf32>,
      %c0_32 = arith.constant 0 : index
      %c0_33 = arith.constant 0 : index
      %47 = vector.load %arg14[%c0_32, %c0_33] : memref<128x1xf32, #tpu.memory_space<vmem>>, vector<128x1xf32>
      %48 = arith.mulf %28, %28 : vector<128x256xf32>
      %cst_34 = arith.constant dense<0.000000e+00> : vector<128xf32>
      %49 = vector.multi_reduction <add>, %48, %cst_34 [1] : vector<128x256xf32> to vector<128xf32>
      %50 = vector.shape_cast %49 : vector<128xf32> to vector<128x1xf32>
      %51 = arith.addf %47, %50 : vector<128x1xf32>
      %c0_35 = arith.constant 0 : index
      %c0_36 = arith.constant 0 : index
      %52 = vector.load %arg14[%c0_35, %c0_36] : memref<128x1xf32, #tpu.memory_space<vmem>>, vector<128x1xf32>
      tpu.vector_store %arg14[%c0_35, %c0_36], %51 {strides = array<i32>} : memref<128x1xf32, #tpu.memory_space<vmem>>, vector<128x1xf32>,
    } else {
    }
    %c0_i32_22 = arith.constant 0 : i32
    %32 = arith.cmpi eq, %arg0, %c0_i32_22 : i32
    %c1_i32 = arith.constant 1 : i32
    %33 = arith.cmpi eq, %arg1, %c1_i32 : i32
    %34 = arith.andi %32, %33 : i1
    %c0_i32_23 = arith.constant 0 : i32
    %35 = arith.cmpi eq, %arg2, %c0_i32_23 : i32
    %36 = arith.andi %34, %35 : i1
    %37 = arith.extui %36 : i1 to i32
    %c0_i32_24 = arith.constant 0 : i32
    %38 = arith.cmpi ne, %37, %c0_i32_24 : i32
    scf.if %38 {
      %c0_27 = arith.constant 0 : index
      %c0_28 = arith.constant 0 : index
      %42 = vector.load %arg13[%c0_27, %c0_28] : memref<128x1xf32, #tpu.memory_space<vmem>>, vector<128x1xf32>
      %cst_29 = arith.constant 0.001953125 : f32
      %43 = vector.broadcast %cst_29 : f32 to vector<128x1xf32>
      %44 = arith.mulf %42, %43 : vector<128x1xf32>
      %c0_30 = arith.constant 0 : index
      %c0_31 = arith.constant 0 : index
      %45 = vector.load %arg14[%c0_30, %c0_31] : memref<128x1xf32, #tpu.memory_space<vmem>>, vector<128x1xf32>
      %cst_32 = arith.constant 0.001953125 : f32
      %46 = vector.broadcast %cst_32 : f32 to vector<128x1xf32>
      %47 = arith.mulf %45, %46 : vector<128x1xf32>
      %48 = arith.mulf %44, %44 : vector<128x1xf32>
      %49 = arith.subf %47, %48 : vector<128x1xf32>
      %cst_33 = arith.constant 0.000000e+00 : f32
      %50 = vector.broadcast %cst_33 : f32 to vector<128x1xf32>
      %51 = arith.maximumf %49, %50 : vector<128x1xf32>
      %c0_34 = arith.constant 0 : index
      %c0_35 = arith.constant 0 : index
      %52 = vector.load %arg9[%c0_34, %c0_35] : memref<128x1xf32, #tpu.memory_space<vmem>>, vector<128x1xf32>
      %cst_36 = arith.constant 9.99999974E-6 : f32
      %53 = vector.broadcast %cst_36 : f32 to vector<128x1xf32>
      %54 = arith.addf %51, %53 : vector<128x1xf32>
      %55 = math.rsqrt %54 : vector<128x1xf32>
      %56 = arith.mulf %52, %55 : vector<128x1xf32>
      %c0_37 = arith.constant 0 : index
      %c0_38 = arith.constant 0 : index
      %57 = vector.load %arg15[%c0_37, %c0_38] : memref<128x1xf32, #tpu.memory_space<vmem>>, vector<128x1xf32>
      tpu.vector_store %arg15[%c0_37, %c0_38], %56 {strides = array<i32>} : memref<128x1xf32, #tpu.memory_space<vmem>>, vector<128x1xf32>,
      %c0_39 = arith.constant 0 : index
      %c0_40 = arith.constant 0 : index
      %58 = vector.load %arg10[%c0_39, %c0_40] : memref<128x1xf32, #tpu.memory_space<vmem>>, vector<128x1xf32>
      %59 = arith.mulf %44, %56 : vector<128x1xf32>
      %60 = arith.subf %58, %59 : vector<128x1xf32>
      %c0_41 = arith.constant 0 : index
      %c0_42 = arith.constant 0 : index
      %61 = vector.load %arg16[%c0_41, %c0_42] : memref<128x1xf32, #tpu.memory_space<vmem>>, vector<128x1xf32>
      tpu.vector_store %arg16[%c0_41, %c0_42], %60 {strides = array<i32>} : memref<128x1xf32, #tpu.memory_space<vmem>>, vector<128x1xf32>,
    } else {
    }
    %c1_i32_25 = arith.constant 1 : i32
    %39 = arith.cmpi eq, %arg0, %c1_i32_25 : i32
    %40 = arith.extui %39 : i1 to i32
    %c0_i32_26 = arith.constant 0 : i32
    %41 = arith.cmpi ne, %40, %c0_i32_26 : i32
    scf.if %41 {
      %c0_27 = arith.constant 0 : index
      %c0_28 = arith.constant 0 : index
      %42 = vector.load %arg15[%c0_27, %c0_28] : memref<128x1xf32, #tpu.memory_space<vmem>>, vector<128x1xf32>
      %43 = vector.broadcast %42 : vector<128x1xf32> to vector<128x256xf32>
      %44 = arith.mulf %28, %43 : vector<128x256xf32>
      %c0_29 = arith.constant 0 : index
      %c0_30 = arith.constant 0 : index
      %45 = vector.load %arg16[%c0_29, %c0_30] : memref<128x1xf32, #tpu.memory_space<vmem>>, vector<128x1xf32>
      %46 = vector.broadcast %45 : vector<128x1xf32> to vector<128x256xf32>
      %47 = arith.addf %44, %46 : vector<128x256xf32>
      %cst_31 = arith.constant 0.000000e+00 : f32
      %48 = vector.broadcast %cst_31 : f32 to vector<128x256xf32>
      %49 = arith.cmpf ogt, %47, %48 : vector<128x256xf32>
      %cst_32 = arith.constant 2.000000e-01 : f32
      %50 = vector.broadcast %cst_32 : f32 to vector<128x256xf32>
      %51 = arith.mulf %50, %47 : vector<128x256xf32>
      %52 = arith.select %49, %47, %51 : vector<128x256xi1>, vector<128x256xf32>
      %c0_33 = arith.constant 0 : index
      %c0_34 = arith.constant 0 : index
      %53 = vector.load %arg11[%c0_33, %c0_34] : memref<128x1xf32, #tpu.memory_space<vmem>>, vector<128x1xf32>
      %54 = vector.broadcast %53 : vector<128x1xf32> to vector<128x256xf32>
      %55 = arith.mulf %52, %54 : vector<128x256xf32>
      %cst_35 = arith.constant dense<0.000000e+00> : vector<256xf32>
      %56 = vector.multi_reduction <add>, %55, %cst_35 [0] : vector<128x256xf32> to vector<256xf32>
      %57 = vector.shape_cast %56 : vector<256xf32> to vector<1x256xf32>
      %58 = arith.negf %57 : vector<1x256xf32>
      %59 = math.exp %58 : vector<1x256xf32>
      %cst_36 = arith.constant 1.000000e+00 : f32
      %60 = vector.broadcast %cst_36 : f32 to vector<1x256xf32>
      %61 = arith.addf %60, %59 : vector<1x256xf32>
      %62 = arith.divf %60, %61 : vector<1x256xf32>
      %63 = vector.shape_cast %62 : vector<1x256xf32> to vector<1x1x256xf32>
      %cst_37 = arith.constant dense<0.000000e+00> : vector<1xf32>
      %64 = vector.multi_reduction <add>, %63, %cst_37 [1, 2] : vector<1x1x256xf32> to vector<1xf32>
      %65 = vector.shape_cast %64 : vector<1xf32> to vector<1x1x1xf32>
      %66 = vector.extract %65[0, 0, 0] : f32 from vector<1x1x1xf32>
      %cst_38 = arith.constant 3.906250e-03 : f32
      %67 = arith.mulf %66, %cst_38 : f32
      %68 = tpu.iota {dimensions = array<i32: 0>} : vector<2x1xi32>
      %c0_39 = arith.constant 0 : index
      %c0_40 = arith.constant 0 : index
      %69 = vector.load %arg12[%c0_39, %c0_40] : memref<2x1xf32, #tpu.memory_space<vmem>>, vector<2x1xf32>
      %70 = vector.broadcast %arg1 : i32 to vector<2x1xi32>
      %71 = arith.cmpi eq, %68, %70 : vector<2x1xi32>
      %cst_41 = arith.constant 0.000000e+00 : f32
      %72 = vector.broadcast %67 : f32 to vector<2x1xf32>
      %73 = vector.broadcast %cst_41 : f32 to vector<2x1xf32>
      %74 = arith.select %71, %72, %73 : vector<2x1xi1>, vector<2x1xf32>
      %75 = arith.addf %69, %74 : vector<2x1xf32>
      %c0_42 = arith.constant 0 : index
      %c0_43 = arith.constant 0 : index
      %76 = vector.load %arg12[%c0_42, %c0_43] : memref<2x1xf32, #tpu.memory_space<vmem>>, vector<2x1xf32>
      tpu.vector_store %arg12[%c0_42, %c0_43], %75 {strides = array<i32>} : memref<2x1xf32, #tpu.memory_space<vmem>>, vector<2x1xf32>,
    } else {
    }
    return
  }
  func.func @transform_0(%arg0: i32, %arg1: i32, %arg2: i32) -> (i32, i32, i32) {
    %c0_i32 = arith.constant 0 : i32
    %c0_i32_0 = arith.constant 0 : i32
    return %arg1, %c0_i32, %arg2 : i32, i32, i32
  }
  func.func @transform_1(%arg0: i32, %arg1: i32, %arg2: i32) -> (i32, i32, i32) {
    %c0_i32 = arith.constant 0 : i32
    %c0_i32_0 = arith.constant 0 : i32
    return %arg1, %c0_i32, %arg2 : i32, i32, i32
  }
  func.func @transform_2(%arg0: i32, %arg1: i32, %arg2: i32) -> (i32, i32) {
    %c0_i32 = arith.constant 0 : i32
    %c0_i32_0 = arith.constant 0 : i32
    %c0_i32_1 = arith.constant 0 : i32
    return %c0_i32, %c0_i32_0 : i32, i32
  }
  func.func @transform_3(%arg0: i32, %arg1: i32, %arg2: i32) -> (i32, i32) {
    %c0_i32 = arith.constant 0 : i32
    %c0_i32_0 = arith.constant 0 : i32
    %c0_i32_1 = arith.constant 0 : i32
    return %c0_i32, %c0_i32_0 : i32, i32
  }
  func.func @transform_4(%arg0: i32, %arg1: i32, %arg2: i32) -> (i32, i32) {
    %c0_i32 = arith.constant 0 : i32
    %c0_i32_0 = arith.constant 0 : i32
    %c0_i32_1 = arith.constant 0 : i32
    return %c0_i32, %c0_i32_0 : i32, i32
  }
  func.func @transform_5(%arg0: i32, %arg1: i32, %arg2: i32) -> (i32, i32) {
    %c0_i32 = arith.constant 0 : i32
    %c0_i32_0 = arith.constant 0 : i32
    %c0_i32_1 = arith.constant 0 : i32
    return %c0_i32, %c0_i32_0 : i32, i32
  }
  func.func @transform_6(%arg0: i32, %arg1: i32, %arg2: i32) -> (i32, i32) {
    %c0_i32 = arith.constant 0 : i32
    %c0_i32_0 = arith.constant 0 : i32
    %c0_i32_1 = arith.constant 0 : i32
    return %c0_i32, %c0_i32_0 : i32, i32
  }
  func.func @transform_7(%arg0: i32, %arg1: i32, %arg2: i32) -> (i32, i32) {
    %c0_i32 = arith.constant 0 : i32
    %c0_i32_0 = arith.constant 0 : i32
    %c0_i32_1 = arith.constant 0 : i32
    return %c0_i32, %c0_i32_0 : i32, i32
  }
  func.func @transform_8(%arg0: i32, %arg1: i32, %arg2: i32) -> (i32, i32) {
    %c0_i32 = arith.constant 0 : i32
    %c0_i32_0 = arith.constant 0 : i32
    %c0_i32_1 = arith.constant 0 : i32
    return %c0_i32, %c0_i32_0 : i32, i32
  }
  func.func @transform_9(%arg0: i32, %arg1: i32, %arg2: i32) -> (i32, i32) {
    %c0_i32 = arith.constant 0 : i32
    %c0_i32_0 = arith.constant 0 : i32
    %c0_i32_1 = arith.constant 0 : i32
    return %c0_i32, %c0_i32_0 : i32, i32
  }
}

</mosaic_0001>

<llo_original>
// kernel: tpu_custom_call.1
$region0: #{tpu_custom_call.1}
  #allocation0 [shape = 'u32[]', space=smem, size = 0x4, offset = 0x4, fixed_abs, tag = 'smem constant byte address 0x4 - core index']
  #allocation1 [shape = 'u32[144,128]{1,0:T(1,128)}', space=vmem, size = 0x12000, scoped, tag = 'internal scratch']
  #allocation2 [shape = 'f32[128,1]{1,0:T(8,128)}', space=vmem, size = 0x10000, scoped, tag = 'scratch operand']
  #allocation3 [shape = 'f32[128,1]{1,0:T(8,128)}', space=vmem, size = 0x10000, scoped, tag = 'scratch operand']
  #allocation4 [shape = 'f32[128,1]{1,0:T(8,128)}', space=vmem, size = 0x10000, scoped, tag = 'scratch operand']
  #allocation5 [shape = 'f32[128,1]{1,0:T(8,128)}', space=vmem, size = 0x10000, scoped, tag = 'scratch operand']
  %s0 = inlined_call_operand.vmem [shape: f32[2,3,256], index: 0, kind: input, shape index: {}]
  %s1 = inlined_call_operand.vmem [shape: f32[2,3,256], index: 1, kind: input, shape index: {}]
  %s2 = inlined_call_operand.vmem [shape: bf16[64,3], index: 2, kind: input, shape index: {}]
  %s3 = inlined_call_operand.vmem [shape: bf16[64,3], index: 3, kind: input, shape index: {}]
  %s4 = inlined_call_operand.vmem [shape: f32[64,1], index: 4, kind: input, shape index: {}]
  %s5 = inlined_call_operand.vmem [shape: bf16[128,64], index: 5, kind: input, shape index: {}]
  %s6 = inlined_call_operand.vmem [shape: f32[128,1], index: 6, kind: input, shape index: {}]
  %s7 = inlined_call_operand.vmem [shape: f32[128,1], index: 7, kind: input, shape index: {}]
  %s8 = inlined_call_operand.vmem [shape: f32[128,1], index: 8, kind: input, shape index: {}]
  %s9 = inlined_call_operand.vmem [shape: f32[2,1], index: 9, kind: output, shape index: {}]
  %s10 = sld [smem:[#allocation0]]
  $region85: #{tpu_custom_call.1} parent=0
    _
  %s12 = ssub.s32 1, %s10
  %s13 = scalar_select 0, %s12, %s10
  loop: start=0, step=1, limit=6
  $region2: #{tpu_custom_call.1} parent=0 // loop_pre_header
    _
  $region3: #{tpu_custom_call.1} parent=0 // loop_header
    %s15 = sphi 0, %s19
    %p16 = scmp.ge.s32.totalorder %s15, 6
    %s22 = sphi 0, %s41
    %s23 = sphi 0, %s37
    %s24 = sphi 0, %s33
    %s25 = sphi 0, %s22
    %s26 = sphi 0, %s23
    %s27 = sphi 0, %s24
    %s28 = sphi 0, %s25
    %s29 = sphi 0, %s26
    %s30 = sphi 0, %s27
    %s46 = sphi 0, %s48
    %s49 = sphi 0, %s46
    %s50 = sphi 0, %s49
    %s66 = sphi 0, %s50
    %s74 = sphi 0, %s76
    %s77 = sphi 0, %s74
    %s78 = sphi 0, %s77
    %s94 = sphi 0, %s78
    %s98 = sphi 0, %s98
    %s100 = sphi 0, %s98
    %s101 = sphi 0, %s100
    %s115 = sphi 0, %s101
    %s119 = sphi 0, %s119
    %s121 = sphi 0, %s119
    %s122 = sphi 0, %s121
    %s136 = sphi 0, %s122
    %s140 = sphi 0, %s140
    %s142 = sphi 0, %s140
    %s143 = sphi 0, %s142
    %s157 = sphi 0, %s143
    %s161 = sphi 0, %s161
    %s163 = sphi 0, %s161
    %s164 = sphi 0, %s163
    %s178 = sphi 0, %s164
    %s182 = sphi 0, %s182
    %s184 = sphi 0, %s182
    %s185 = sphi 0, %s184
    %s199 = sphi 0, %s185
    %s203 = sphi 0, %s203
    %s205 = sphi 0, %s203
    %s206 = sphi 0, %s205
    %s220 = sphi 0, %s206
    %s224 = sphi 0, %s224
    %s226 = sphi 0, %s224
    %s227 = sphi 0, %s226
    %s241 = sphi 0, %s227
    %s245 = sphi 0, %s245
    %s247 = sphi 0, %s245
    %s248 = sphi 0, %s247
    %s262 = sphi 0, %s248
  $region4: #{tpu_custom_call.1} parent=0 // loop_header_branch
    %18 = sbr.rel (%p16) target = $region8
  $region5: #{tpu_custom_call.1} parent=0 // loop_body
    %s20 = ssub.s32 %s15, 1
    %s21 = ssub.s32 %s15, 2
    %s31 = sadd.s32 1, %s24
    %p32 = scmp.ge.s32.totalorder %s31, 1
    %s33 = scalar_select %p32, 0, %s31
    %s34 = sadd.s32 1, %s23
    %s35 = scalar_select %p32, %s34, %s23
    %p36 = scmp.ge.s32.totalorder %s35, 2
    %s37 = scalar_select %p36, 0, %s35
    %s38 = sadd.s32 1, %s22
    %s39 = scalar_select %p36, %s38, %s22
    %p40 = scmp.ge.s32.totalorder %s39, 2
    %s41 = scalar_select %p40, 0, %s39
    %s42 = ssub.s32 %s23, %s37
    %s43 = ssub.s32 %s24, %s33
    %s44 = sor.u32 %s42, %s43
    %p45 = scmp.eq.s32.totalorder %s44, 0
    %s47 = sadd.s32 %s46, 1
    %s48 = scalar_select %p45, %s46, %s47
    %p51 = pneg %p45
    %p52 = scmp.eq.s32.totalorder %s15, 3
    %p53 = por %p51, %p52
    %p54 = scmp.ne.s32.totalorder %s46, %s49
    %p55 = scmp.eq.s32.totalorder %s15, 0
    %p56 = por %p54, %p55
    %p57 = scmp.ne.s32.totalorder %s46, %s49
    %p58 = scmp.eq.s32.totalorder %s20, 3
    %p59 = por %p57, %p58
    %p60 = scmp.ne.s32.totalorder %s49, %s50
    %p61 = scmp.eq.s32.totalorder %s20, 0
    %p62 = por %p60, %p61
    %p63 = scmp.ne.s32.totalorder %s49, %s50
    %p64 = scmp.eq.s32.totalorder %s21, 3
    %p65 = por %p63, %p64
    %p67 = scmp.ne.s32.totalorder %s50, %s66
    %p68 = scmp.eq.s32.totalorder %s21, 0
    %p69 = por %p67, %p68
    %s70 = ssub.s32 %s23, %s37
    %s71 = ssub.s32 %s24, %s33
    %s72 = sor.u32 %s70, %s71
    %p73 = scmp.eq.s32.totalorder %s72, 0
    %s75 = sadd.s32 %s74, 1
    %s76 = scalar_select %p73, %s74, %s75
    %p79 = pneg %p73
    %p80 = scmp.eq.s32.totalorder %s15, 3
    %p81 = por %p79, %p80
    %p82 = scmp.ne.s32.totalorder %s74, %s77
    %p83 = scmp.eq.s32.totalorder %s15, 0
    %p84 = por %p82, %p83
    %p85 = scmp.ne.s32.totalorder %s74, %s77
    %p86 = scmp.eq.s32.totalorder %s20, 3
    %p87 = por %p85, %p86
    %p88 = scmp.ne.s32.totalorder %s77, %s78
    %p89 = scmp.eq.s32.totalorder %s20, 0
    %p90 = por %p88, %p89
    %p91 = scmp.ne.s32.totalorder %s77, %s78
    %p92 = scmp.eq.s32.totalorder %s21, 3
    %p93 = por %p91, %p92
    %p95 = scmp.ne.s32.totalorder %s78, %s94
    %p96 = scmp.eq.s32.totalorder %s21, 0
    %p97 = por %p95, %p96
    %s99 = sadd.s32 %s98, 1
    %p102 = scmp.eq.s32.totalorder %s15, 3
    %p103 = scmp.ne.s32.totalorder %s98, %s100
    %p104 = scmp.eq.s32.totalorder %s15, 0
    %p105 = por %p103, %p104
    %p106 = scmp.ne.s32.totalorder %s98, %s100
    %p107 = scmp.eq.s32.totalorder %s20, 3
    %p108 = por %p106, %p107
    %p109 = scmp.ne.s32.totalorder %s100, %s101
    %p110 = scmp.eq.s32.totalorder %s20, 0
    %p111 = por %p109, %p110
    %p112 = scmp.ne.s32.totalorder %s100, %s101
    %p113 = scmp.eq.s32.totalorder %s21, 3
    %p114 = por %p112, %p113
    %p116 = scmp.ne.s32.totalorder %s101, %s115
    %p117 = scmp.eq.s32.totalorder %s21, 0
    %p118 = por %p116, %p117
    %s120 = sadd.s32 %s119, 1
    %p123 = scmp.eq.s32.totalorder %s15, 3
    %p124 = scmp.ne.s32.totalorder %s119, %s121
    %p125 = scmp.eq.s32.totalorder %s15, 0
    %p126 = por %p124, %p125
    %p127 = scmp.ne.s32.totalorder %s119, %s121
    %p128 = scmp.eq.s32.totalorder %s20, 3
    %p129 = por %p127, %p128
    %p130 = scmp.ne.s32.totalorder %s121, %s122
    %p131 = scmp.eq.s32.totalorder %s20, 0
    %p132 = por %p130, %p131
    %p133 = scmp.ne.s32.totalorder %s121, %s122
    %p134 = scmp.eq.s32.totalorder %s21, 3
    %p135 = por %p133, %p134
    %p137 = scmp.ne.s32.totalorder %s122, %s136
    %p138 = scmp.eq.s32.totalorder %s21, 0
    %p139 = por %p137, %p138
    %s141 = sadd.s32 %s140, 1
    %p144 = scmp.eq.s32.totalorder %s15, 3
    %p145 = scmp.ne.s32.totalorder %s140, %s142
    %p146 = scmp.eq.s32.totalorder %s15, 0
    %p147 = por %p145, %p146
    %p148 = scmp.ne.s32.totalorder %s140, %s142
    %p149 = scmp.eq.s32.totalorder %s20, 3
    %p150 = por %p148, %p149
    %p151 = scmp.ne.s32.totalorder %s142, %s143
    %p152 = scmp.eq.s32.totalorder %s20, 0
    %p153 = por %p151, %p152
    %p154 = scmp.ne.s32.totalorder %s142, %s143
    %p155 = scmp.eq.s32.totalorder %s21, 3
    %p156 = por %p154, %p155
    %p158 = scmp.ne.s32.totalorder %s143, %s157
    %p159 = scmp.eq.s32.totalorder %s21, 0
    %p160 = por %p158, %p159
    %s162 = sadd.s32 %s161, 1
    %p165 = scmp.eq.s32.totalorder %s15, 3
    %p166 = scmp.ne.s32.totalorder %s161, %s163
    %p167 = scmp.eq.s32.totalorder %s15, 0
    %p168 = por %p166, %p167
    %p169 = scmp.ne.s32.totalorder %s161, %s163
    %p170 = scmp.eq.s32.totalorder %s20, 3
    %p171 = por %p169, %p170
    %p172 = scmp.ne.s32.totalorder %s163, %s164
    %p173 = scmp.eq.s32.totalorder %s20, 0
    %p174 = por %p172, %p173
    %p175 = scmp.ne.s32.totalorder %s163, %s164
    %p176 = scmp.eq.s32.totalorder %s21, 3
    %p177 = por %p175, %p176
    %p179 = scmp.ne.s32.totalorder %s164, %s178
    %p180 = scmp.eq.s32.totalorder %s21, 0
    %p181 = por %p179, %p180
    %s183 = sadd.s32 %s182, 1
    %p186 = scmp.eq.s32.totalorder %s15, 3
    %p187 = scmp.ne.s32.totalorder %s182, %s184
    %p188 = scmp.eq.s32.totalorder %s15, 0
    %p189 = por %p187, %p188
    %p190 = scmp.ne.s32.totalorder %s182, %s184
    %p191 = scmp.eq.s32.totalorder %s20, 3
    %p192 = por %p190, %p191
    %p193 = scmp.ne.s32.totalorder %s184, %s185
    %p194 = scmp.eq.s32.totalorder %s20, 0
    %p195 = por %p193, %p194
    %p196 = scmp.ne.s32.totalorder %s184, %s185
    %p197 = scmp.eq.s32.totalorder %s21, 3
    %p198 = por %p196, %p197
    %p200 = scmp.ne.s32.totalorder %s185, %s199
    %p201 = scmp.eq.s32.totalorder %s21, 0
    %p202 = por %p200, %p201
    %s204 = sadd.s32 %s203, 1
    %p207 = scmp.eq.s32.totalorder %s15, 3
    %p208 = scmp.ne.s32.totalorder %s203, %s205
    %p209 = scmp.eq.s32.totalorder %s15, 0
    %p210 = por %p208, %p209
    %p211 = scmp.ne.s32.totalorder %s203, %s205
    %p212 = scmp.eq.s32.totalorder %s20, 3
    %p213 = por %p211, %p212
    %p214 = scmp.ne.s32.totalorder %s205, %s206
    %p215 = scmp.eq.s32.totalorder %s20, 0
    %p216 = por %p214, %p215
    %p217 = scmp.ne.s32.totalorder %s205, %s206
    %p218 = scmp.eq.s32.totalorder %s21, 3
    %p219 = por %p217, %p218
    %p221 = scmp.ne.s32.totalorder %s206, %s220
    %p222 = scmp.eq.s32.totalorder %s21, 0
    %p223 = por %p221, %p222
    %s225 = sadd.s32 %s224, 1
    %p228 = scmp.eq.s32.totalorder %s15, 3
    %p229 = scmp.ne.s32.totalorder %s224, %s226
    %p230 = scmp.eq.s32.totalorder %s15, 0
    %p231 = por %p229, %p230
    %p232 = scmp.ne.s32.totalorder %s224, %s226
    %p233 = scmp.eq.s32.totalorder %s20, 3
    %p234 = por %p232, %p233
    %p235 = scmp.ne.s32.totalorder %s226, %s227
    %p236 = scmp.eq.s32.totalorder %s20, 0
    %p237 = por %p235, %p236
    %p238 = scmp.ne.s32.totalorder %s226, %s227
    %p239 = scmp.eq.s32.totalorder %s21, 3
    %p240 = por %p238, %p239
    %p242 = scmp.ne.s32.totalorder %s227, %s241
    %p243 = scmp.eq.s32.totalorder %s21, 0
    %p244 = por %p242, %p243
    %s246 = sadd.s32 %s245, 1
    %p249 = scmp.eq.s32.totalorder %s15, 3
    %p250 = scmp.ne.s32.totalorder %s245, %s247
    %p251 = scmp.eq.s32.totalorder %s15, 0
    %p252 = por %p250, %p251
    %p253 = scmp.ne.s32.totalorder %s245, %s247
    %p254 = scmp.eq.s32.totalorder %s20, 3
    %p255 = por %p253, %p254
    %p256 = scmp.ne.s32.totalorder %s247, %s248
    %p257 = scmp.eq.s32.totalorder %s20, 0
    %p258 = por %p256, %p257
    %p259 = scmp.ne.s32.totalorder %s247, %s248
    %p260 = scmp.eq.s32.totalorder %s21, 3
    %p261 = por %p259, %p260
    %p263 = scmp.ne.s32.totalorder %s248, %s262
    %p264 = scmp.eq.s32.totalorder %s21, 0
    %p265 = por %p263, %p264
    %p266 = scmp.le.s32.totalorder 1, %s15
    %p267 = scmp.lt.s32.totalorder %s15, 5
    %p268 = pnand %p266, %p267
    %p269 = pneg %p268
    // Predicated region
    $region9: #{tpu_custom_call.1} parent=5 // pred_check
      _
    $region10: #{tpu_custom_call.1} parent=5 // pred_check_branch
      %271 = sbr.rel (%p268) target = $region12
    $region11: #{tpu_custom_call.1} parent=5 // pred_region
      %s272 = ssub.s32 %s15, 1
      // Predicated region
      $region13: #{tpu_custom_call.1} parent=11 // pred_check
        %p273 = pneg %p111
      $region14: #{tpu_custom_call.1} parent=11 // pred_check_branch
        %275 = sbr.rel (%p273) target = $region16
      $region15: #{tpu_custom_call.1} parent=11 // pred_region
        _
      $region16: #{tpu_custom_call.1} parent=11 // pred_fallthru
        _
      // Predicated region
      $region17: #{tpu_custom_call.1} parent=11 // pred_check
        %p276 = pneg %p132
      $region18: #{tpu_custom_call.1} parent=11 // pred_check_branch
        %278 = sbr.rel (%p276) target = $region20
      $region19: #{tpu_custom_call.1} parent=11 // pred_region
        _
      $region20: #{tpu_custom_call.1} parent=11 // pred_fallthru
        _
      // Predicated region
      $region21: #{tpu_custom_call.1} parent=11 // pred_check
        %p279 = pneg %p153
      $region22: #{tpu_custom_call.1} parent=11 // pred_check_branch
        %281 = sbr.rel (%p279) target = $region24
      $region23: #{tpu_custom_call.1} parent=11 // pred_region
        _
      $region24: #{tpu_custom_call.1} parent=11 // pred_fallthru
        _
      // Predicated region
      $region25: #{tpu_custom_call.1} parent=11 // pred_check
        %p282 = pneg %p174
      $region26: #{tpu_custom_call.1} parent=11 // pred_check_branch
        %284 = sbr.rel (%p282) target = $region28
      $region27: #{tpu_custom_call.1} parent=11 // pred_region
        _
      $region28: #{tpu_custom_call.1} parent=11 // pred_fallthru
        _
      // Predicated region
      $region29: #{tpu_custom_call.1} parent=11 // pred_check
        %p285 = pneg %p195
      $region30: #{tpu_custom_call.1} parent=11 // pred_check_branch
        %287 = sbr.rel (%p285) target = $region32
      $region31: #{tpu_custom_call.1} parent=11 // pred_region
        _
      $region32: #{tpu_custom_call.1} parent=11 // pred_fallthru
        _
      // Predicated region
      $region33: #{tpu_custom_call.1} parent=11 // pred_check
        %p288 = pneg %p216
      $region34: #{tpu_custom_call.1} parent=11 // pred_check_branch
        %290 = sbr.rel (%p288) target = $region36
      $region35: #{tpu_custom_call.1} parent=11 // pred_region
        _
      $region36: #{tpu_custom_call.1} parent=11 // pred_fallthru
        _
      // Predicated region
      $region37: #{tpu_custom_call.1} parent=11 // pred_check
        %p291 = pneg %p237
      $region38: #{tpu_custom_call.1} parent=11 // pred_check_branch
        %293 = sbr.rel (%p291) target = $region40
      $region39: #{tpu_custom_call.1} parent=11 // pred_region
        _
      $region40: #{tpu_custom_call.1} parent=11 // pred_fallthru
        _
    $region12: #{tpu_custom_call.1} parent=5 // pred_fallthru
      _
    %p294 = scmp.lt.s32.totalorder %s15, 4
    // Predicated region
    $region41: #{tpu_custom_call.1} parent=5 // pred_check
      %p295 = pneg %p294
    $region42: #{tpu_custom_call.1} parent=5 // pred_check_branch
      %297 = sbr.rel (%p295) target = $region44
    $region43: #{tpu_custom_call.1} parent=5 // pred_region
      // Predicated region
      $region45: #{tpu_custom_call.1} parent=43 // pred_check
        %p298 = pneg %p56
      $region46: #{tpu_custom_call.1} parent=43 // pred_check_branch
        %300 = sbr.rel (%p298) target = $region48
      $region47: #{tpu_custom_call.1} parent=43 // pred_region
        %s301 = smul.u32 2, %s24
        %p302 = scmp.lt.s32.totalorder %s23, 1
        %s303 = scalar_select %p302, %s23, 1
        %p304 = scmp.lt.s32.totalorder %s301, 1
        %s305 = scalar_select %p304, %s301, 1
        %s306 = smul.addr %s303, 2
        %s307 = sadd.s32 %s305, %s306
        %s308 = smul.addr %s307, 4
        %s309 = scalar_lea.vmem %s0, %s308
        %s310 = smul.u32 2, %s24
      $region48: #{tpu_custom_call.1} parent=43 // pred_fallthru
        _
      // Predicated region
      $region49: #{tpu_custom_call.1} parent=43 // pred_check
        %p311 = pneg %p84
      $region50: #{tpu_custom_call.1} parent=43 // pred_check_branch
        %313 = sbr.rel (%p311) target = $region52
      $region51: #{tpu_custom_call.1} parent=43 // pred_region
        %s314 = smul.u32 2, %s24
        %p315 = scmp.lt.s32.totalorder %s23, 1
        %s316 = scalar_select %p315, %s23, 1
        %p317 = scmp.lt.s32.totalorder %s314, 1
        %s318 = scalar_select %p317, %s314, 1
        %s319 = smul.addr %s316, 2
        %s320 = sadd.s32 %s318, %s319
        %s321 = smul.addr %s320, 4
        %s322 = scalar_lea.vmem %s1, %s321
        %s323 = smul.u32 2, %s24
      $region52: #{tpu_custom_call.1} parent=43 // pred_fallthru
        _
    $region44: #{tpu_custom_call.1} parent=5 // pred_fallthru
      _
    %p324 = scmp.le.s32.totalorder 1, %s15
    %p325 = scmp.lt.s32.totalorder %s15, 5
    %p326 = pnand %p324, %p325
    %p327 = pneg %p326
    // Predicated region
    $region53: #{tpu_custom_call.1} parent=5 // pred_check
      _
    $region54: #{tpu_custom_call.1} parent=5 // pred_check_branch
      %329 = sbr.rel (%p326) target = $region56
    $region55: #{tpu_custom_call.1} parent=5 // pred_region
      %s330 = ssub.s32 %s15, 1
      %s331 = smul.u32 2, %s27
      %p332 = scmp.lt.s32.totalorder %s26, 1
      %s333 = scalar_select %p332, %s26, 1
      %p334 = scmp.lt.s32.totalorder %s331, 1
      %s335 = scalar_select %p334, %s331, 1
      %s336 = smul.addr %s333, 2
      %s337 = sadd.s32 %s335, %s336
      %s338 = smul.addr %s337, 4
      %s339 = scalar_lea.vmem %s0, %s338
      %p340 = pneg %p62
      %p341 = pneg %p59
      %s342 = smul.u32 2, %s27
      %p343 = scmp.lt.s32.totalorder %s26, 1
      %s344 = scalar_select %p343, %s26, 1
      %p345 = scmp.lt.s32.totalorder %s342, 1
      %s346 = scalar_select %p345, %s342, 1
      %s347 = smul.addr %s344, 2
      %s348 = sadd.s32 %s346, %s347
      %s349 = smul.addr %s348, 4
      %s350 = scalar_lea.vmem %s1, %s349
      %p351 = pneg %p90
      %p352 = pneg %p87
      %p353 = pneg %p111
      %p354 = pneg %p108
      %p355 = pneg %p132
      %p356 = pneg %p129
      %p357 = pneg %p153
      %p358 = pneg %p150
      %p359 = pneg %p174
      %p360 = pneg %p171
      %p361 = pneg %p195
      %p362 = pneg %p192
      %p363 = pneg %p216
      %p364 = pneg %p213
      %p365 = pneg %p237
      %p366 = pneg %p234
      %p367 = pneg %p258
      %p368 = pneg %p255
      %s369 = smul.u32 2, %s27
      %p370 = scmp.lt.s32.totalorder %s26, 1
      %s371 = scalar_select %p370, %s26, 1
      %p372 = scmp.lt.s32.totalorder %s369, 1
      %s373 = scalar_select %p372, %s369, 1
      %s374 = smul.addr %s371, 2
      %s375 = sadd.s32 %s373, %s374
      %s376 = smul.addr %s375, 4
      %s377 = scalar_lea.vmem %s0, %s376
      %s378 = smul.u32 2, %s27
      %s379 = smul.u32 2, %s27
      %p380 = scmp.lt.s32.totalorder %s26, 1
      %s381 = scalar_select %p380, %s26, 1
      %p382 = scmp.lt.s32.totalorder %s379, 1
      %s383 = scalar_select %p382, %s379, 1
      %s384 = smul.addr %s381, 2
      %s385 = sadd.s32 %s383, %s384
      %s386 = smul.addr %s385, 4
      %s387 = scalar_lea.vmem %s1, %s386
      %s388 = smul.u32 2, %s27
      %p390 = scmp.eq.s32.totalorder %s25, 0
      %p391 = scmp.eq.s32.totalorder %s26, 0
      %p392 = pnand %p390, %p391
      %p393 = pneg %p392
      %p394 = scmp.eq.s32.totalorder %s27, 0
      %p395 = pnand %p393, %p394
      %p396 = pneg %p395
      // Predicated region
      $region57: #{tpu_custom_call.1} parent=55 // pred_check
        _
      $region58: #{tpu_custom_call.1} parent=55 // pred_check_branch
        %398 = sbr.rel (%p395) target = $region60
      $region59: #{tpu_custom_call.1} parent=55 // pred_region
        %vm399 = vcmask 7168
        %400 = vst.msk [vmem:[#allocation2] sm:$0xff] %vm399, 0.0
        %401 = vst.msk [vmem:[#allocation2 + $0x8] sm:$0xff] %vm399, 0.0
        %402 = vst.msk [vmem:[#allocation2 + $0x10] sm:$0xff] %vm399, 0.0
        %403 = vst.msk [vmem:[#allocation2 + $0x18] sm:$0xff] %vm399, 0.0
        %404 = vst.msk [vmem:[#allocation2 + $0x20] sm:$0xff] %vm399, 0.0
        %405 = vst.msk [vmem:[#allocation2 + $0x28] sm:$0xff] %vm399, 0.0
        %406 = vst.msk [vmem:[#allocation2 + $0x30] sm:$0xff] %vm399, 0.0
        %407 = vst.msk [vmem:[#allocation2 + $0x38] sm:$0xff] %vm399, 0.0
        %408 = vst.msk [vmem:[#allocation2 + $0x40] sm:$0xff] %vm399, 0.0
        %409 = vst.msk [vmem:[#allocation2 + $0x48] sm:$0xff] %vm399, 0.0
        %410 = vst.msk [vmem:[#allocation2 + $0x50] sm:$0xff] %vm399, 0.0
        %411 = vst.msk [vmem:[#allocation2 + $0x58] sm:$0xff] %vm399, 0.0
        %412 = vst.msk [vmem:[#allocation2 + $0x60] sm:$0xff] %vm399, 0.0
        %413 = vst.msk [vmem:[#allocation2 + $0x68] sm:$0xff] %vm399, 0.0
        %414 = vst.msk [vmem:[#allocation2 + $0x70] sm:$0xff] %vm399, 0.0
        %415 = vst.msk [vmem:[#allocation2 + $0x78] sm:$0xff] %vm399, 0.0
        %416 = vst.msk [vmem:[#allocation3] sm:$0xff] %vm399, 0.0
        %417 = vst.msk [vmem:[#allocation3 + $0x8] sm:$0xff] %vm399, 0.0
        %418 = vst.msk [vmem:[#allocation3 + $0x10] sm:$0xff] %vm399, 0.0
        %419 = vst.msk [vmem:[#allocation3 + $0x18] sm:$0xff] %vm399, 0.0
        %420 = vst.msk [vmem:[#allocation3 + $0x20] sm:$0xff] %vm399, 0.0
        %421 = vst.msk [vmem:[#allocation3 + $0x28] sm:$0xff] %vm399, 0.0
        %422 = vst.msk [vmem:[#allocation3 + $0x30] sm:$0xff] %vm399, 0.0
        %423 = vst.msk [vmem:[#allocation3 + $0x38] sm:$0xff] %vm399, 0.0
        %424 = vst.msk [vmem:[#allocation3 + $0x40] sm:$0xff] %vm399, 0.0
        %425 = vst.msk [vmem:[#allocation3 + $0x48] sm:$0xff] %vm399, 0.0
        %426 = vst.msk [vmem:[#allocation3 + $0x50] sm:$0xff] %vm399, 0.0
        %427 = vst.msk [vmem:[#allocation3 + $0x58] sm:$0xff] %vm399, 0.0
        %428 = vst.msk [vmem:[#allocation3 + $0x60] sm:$0xff] %vm399, 0.0
        %429 = vst.msk [vmem:[#allocation3 + $0x68] sm:$0xff] %vm399, 0.0
        %430 = vst.msk [vmem:[#allocation3 + $0x70] sm:$0xff] %vm399, 0.0
        %431 = vst.msk [vmem:[#allocation3 + $0x78] sm:$0xff] %vm399, 0.0
        %vm432 = vcmask 1024
        %433 = vst.msk [vmem:[%s9] sm:$0x3] %vm432, 0.0
      $region60: #{tpu_custom_call.1} parent=55 // pred_fallthru
        _
      %v434 = vld [vmem:[%s377] sm:$0x77]
      %v436 = vcombine.high %v434, %v434
      %v438 = vpack.c.bf16 %v434, %v434
      %v439 = vpack.c.bf16 %v436, %v436
      %v440 = vld [vmem:[%s387] sm:$0x77]
      %v442 = vcombine.high %v440, %v440
      %v444 = vpack.c.bf16 %v440, %v440
      %v445 = vpack.c.bf16 %v442, %v442
      %v446 = vld [vmem:[%s2] sm:$0xf]
      %v447 = vld [vmem:[%s2 + $0x4] sm:$0xf]
      %v448 = vld [vmem:[%s2 + $0x8] sm:$0xf]
      %v449 = vld [vmem:[%s2 + $0xc] sm:$0xf]
      %v450 = vld [vmem:[%s2 + $0x10] sm:$0xf]
      %v451 = vld [vmem:[%s2 + $0x14] sm:$0xf]
      %v452 = vld [vmem:[%s2 + $0x18] sm:$0xf]
      %v453 = vld [vmem:[%s2 + $0x1c] sm:$0xf]
      %v454 = vld [vmem:[%s3] sm:$0xf]
      %v455 = vld [vmem:[%s3 + $0x4] sm:$0xf]
      %v456 = vld [vmem:[%s3 + $0x8] sm:$0xf]
      %v457 = vld [vmem:[%s3 + $0xc] sm:$0xf]
      %v458 = vld [vmem:[%s3 + $0x10] sm:$0xf]
      %v459 = vld [vmem:[%s3 + $0x14] sm:$0xf]
      %v460 = vld [vmem:[%s3 + $0x18] sm:$0xf]
      %v461 = vld [vmem:[%s3 + $0x1c] sm:$0xf]
      %v470 = vunpack.c.l.b16 %v454
      %v471 = vunpack.c.l.b16 %v455
      %v472 = vunpack.c.l.b16 %v456
      %v473 = vunpack.c.l.b16 %v457
      %v474 = vunpack.c.l.b16 %v458
      %v475 = vunpack.c.l.b16 %v459
      %v476 = vunpack.c.l.b16 %v460
      %v477 = vunpack.c.l.b16 %v461
      %v478 = vpack.c.b16 %v471, %v470
      %v479 = vpack.c.b16 %v473, %v472
      %v480 = vpack.c.b16 %v475, %v474
      %v481 = vpack.c.b16 %v477, %v476
      %vm482 = vcmask 23552
      %v484 = vsel %vm482, %v478, 0
      %v487 = vsel %vm482, %v479, 0
      %v490 = vsel %vm482, %v480, 0
      %v493 = vsel %vm482, %v481, 0
      %vm495 = vcmask 1040384
      %vm496 = vcmask 1041408
      %v497 = vsel %vm495, 4294967295, 65535
      %v498 = vsel %vm496, %v497, 0
      %v500 = vand.u32 %v444, %v498
      %v503 = vand.u32 %v445, %v498
      %505 = vmatprep.subr.bf16.mxu0 %v503
      %506 = vmatpush1.bf16.msra.mxu0 %v500
      %507 = vmatprep.subr.bf16.mxu0 0
      %508 = vmatpush1.bf16.msra.mxu0 0
      %509 = vmatprep.subr.bf16.mxu0 0
      %510 = vmatpush1.bf16.msra.mxu0 0
      %511 = vmatprep.subr.bf16.mxu0 0
      %512 = vmatpush1.bf16.msra.mxu0 0
      %513 = vmatprep.subr.bf16.mxu0 0
      %514 = vmatpush1.bf16.msra.mxu0 0
      %515 = vmatprep.subr.bf16.mxu0 0
      %516 = vmatpush1.bf16.msra.mxu0 0
      %517 = vmatprep.subr.bf16.mxu0 0
      %518 = vmatpush1.bf16.msra.mxu0 0
      %519 = vmatprep.subr.bf16.mxu0 0
      %520 = vmatpush1.bf16.msra.mxu0 0
      %521 = vmatprep.subr.bf16.mxu0 0
      %522 = vmatpush1.bf16.msra.mxu0 0
      %523 = vmatprep.subr.bf16.mxu0 0
      %524 = vmatpush1.bf16.msra.mxu0 0
      %525 = vmatprep.subr.bf16.mxu0 0
      %526 = vmatpush1.bf16.msra.mxu0 0
      %527 = vmatprep.subr.bf16.mxu0 0
      %528 = vmatpush1.bf16.msra.mxu0 0
      %529 = vmatprep.subr.bf16.mxu0 0
      %530 = vmatpush1.bf16.msra.mxu0 0
      %531 = vmatprep.subr.bf16.mxu0 0
      %532 = vmatpush1.bf16.msra.mxu0 0
      %533 = vmatprep.subr.bf16.mxu0 0
      %534 = vmatpush1.bf16.msra.mxu0 0
      %535 = vmatprep.subr.bf16.mxu0 0
      %536 = vmatpush1.bf16.msra.mxu0 0
      %537 = vmatprep.mubr.bf16.mxu0 0
      %538 = vmatmul.mubr.bf16.gmra.mrb[0].mxu0 %v484
      %v539 = vpop.f32.mrb[0].mxu0
      %v540 = vadd.f32 0.0, %v539
      %v541 = vpop.f32.mrb[0].mxu0
      %v542 = vadd.f32 0.0, %v541
      %v543 = vpop.f32.mrb[0].mxu0
      %v544 = vadd.f32 0.0, %v543
      %v545 = vpop.f32.mrb[0].mxu0
      %v546 = vadd.f32 0.0, %v545
      %547 = vmatprep.mubr.bf16.mxu0 0
      %548 = vmatmul.mubr.bf16.gmra.mrb[0].mxu0 %v487
      %v549 = vpop.f32.mrb[0].mxu0
      %v550 = vadd.f32 0.0, %v549
      %v551 = vpop.f32.mrb[0].mxu0
      %v552 = vadd.f32 0.0, %v551
      %v553 = vpop.f32.mrb[0].mxu0
      %v554 = vadd.f32 0.0, %v553
      %v555 = vpop.f32.mrb[0].mxu0
      %v556 = vadd.f32 0.0, %v555
      %557 = vmatprep.mubr.bf16.mxu0 0
      %558 = vmatmul.mubr.bf16.gmra.mrb[0].mxu0 %v490
      %v559 = vpop.f32.mrb[0].mxu0
      %v560 = vadd.f32 0.0, %v559
      %v561 = vpop.f32.mrb[0].mxu0
      %v562 = vadd.f32 0.0, %v561
      %v563 = vpop.f32.mrb[0].mxu0
      %v564 = vadd.f32 0.0, %v563
      %v565 = vpop.f32.mrb[0].mxu0
      %v566 = vadd.f32 0.0, %v565
      %567 = vmatprep.mubr.bf16.mxu0 0
      %568 = vmatmul.mubr.bf16.gmra.mrb[0].mxu0 %v493
      %v569 = vpop.f32.mrb[0].mxu0
      %v570 = vadd.f32 0.0, %v569
      %v571 = vpop.f32.mrb[0].mxu0
      %v572 = vadd.f32 0.0, %v571
      %v573 = vpop.f32.mrb[0].mxu0
      %v574 = vadd.f32 0.0, %v573
      %v575 = vpop.f32.mrb[0].mxu0
      %v576 = vadd.f32 0.0, %v575
      %577 = vdwg.mxu0
      %v586 = vunpack.c.l.b16 %v446
      %v587 = vunpack.c.l.b16 %v447
      %v588 = vunpack.c.l.b16 %v448
      %v589 = vunpack.c.l.b16 %v449
      %v590 = vunpack.c.l.b16 %v450
      %v591 = vunpack.c.l.b16 %v451
      %v592 = vunpack.c.l.b16 %v452
      %v593 = vunpack.c.l.b16 %v453
      %v594 = vpack.c.b16 %v587, %v586
      %v595 = vpack.c.b16 %v589, %v588
      %v596 = vpack.c.b16 %v591, %v590
      %v597 = vpack.c.b16 %v593, %v592
      %v599 = vsel %vm482, %v594, 0
      %v602 = vsel %vm482, %v595, 0
      %v605 = vsel %vm482, %v596, 0
      %v608 = vsel %vm482, %v597, 0
      %v611 = vand.u32 %v438, %v498
      %v614 = vand.u32 %v439, %v498
      %616 = vmatprep.subr.bf16.mxu0 %v614
      %617 = vmatpush1.bf16.msra.mxu0 %v611
      %618 = vmatprep.subr.bf16.mxu0 0
      %619 = vmatpush1.bf16.msra.mxu0 0
      %620 = vmatprep.subr.bf16.mxu0 0
      %621 = vmatpush1.bf16.msra.mxu0 0
      %622 = vmatprep.subr.bf16.mxu0 0
      %623 = vmatpush1.bf16.msra.mxu0 0
      %624 = vmatprep.subr.bf16.mxu0 0
      %625 = vmatpush1.bf16.msra.mxu0 0
      %626 = vmatprep.subr.bf16.mxu0 0
      %627 = vmatpush1.bf16.msra.mxu0 0
      %628 = vmatprep.subr.bf16.mxu0 0
      %629 = vmatpush1.bf16.msra.mxu0 0
      %630 = vmatprep.subr.bf16.mxu0 0
      %631 = vmatpush1.bf16.msra.mxu0 0
      %632 = vmatprep.subr.bf16.mxu0 0
      %633 = vmatpush1.bf16.msra.mxu0 0
      %634 = vmatprep.subr.bf16.mxu0 0
      %635 = vmatpush1.bf16.msra.mxu0 0
      %636 = vmatprep.subr.bf16.mxu0 0
      %637 = vmatpush1.bf16.msra.mxu0 0
      %638 = vmatprep.subr.bf16.mxu0 0
      %639 = vmatpush1.bf16.msra.mxu0 0
      %640 = vmatprep.subr.bf16.mxu0 0
      %641 = vmatpush1.bf16.msra.mxu0 0
      %642 = vmatprep.subr.bf16.mxu0 0
      %643 = vmatpush1.bf16.msra.mxu0 0
      %644 = vmatprep.subr.bf16.mxu0 0
      %645 = vmatpush1.bf16.msra.mxu0 0
      %646 = vmatprep.subr.bf16.mxu0 0
      %647 = vmatpush1.bf16.msra.mxu0 0
      %648 = vmatprep.mubr.bf16.mxu0 0
      %649 = vmatmul.mubr.bf16.gmra.mrb[0].mxu0 %v599
      %v650 = vpop.f32.mrb[0].mxu0
      %v651 = vadd.f32 %v540, %v650
      %v652 = vpop.f32.mrb[0].mxu0
      %v653 = vadd.f32 %v542, %v652
      %v654 = vpop.f32.mrb[0].mxu0
      %v655 = vadd.f32 %v544, %v654
      %v656 = vpop.f32.mrb[0].mxu0
      %v657 = vadd.f32 %v546, %v656
      %658 = vmatprep.mubr.bf16.mxu0 0
      %659 = vmatmul.mubr.bf16.gmra.mrb[0].mxu0 %v602
      %v660 = vpop.f32.mrb[0].mxu0
      %v661 = vadd.f32 %v550, %v660
      %v662 = vpop.f32.mrb[0].mxu0
      %v663 = vadd.f32 %v552, %v662
      %v664 = vpop.f32.mrb[0].mxu0
      %v665 = vadd.f32 %v554, %v664
      %v666 = vpop.f32.mrb[0].mxu0
      %v667 = vadd.f32 %v556, %v666
      %668 = vmatprep.mubr.bf16.mxu0 0
      %669 = vmatmul.mubr.bf16.gmra.mrb[0].mxu0 %v605
      %v670 = vpop.f32.mrb[0].mxu0
      %v671 = vadd.f32 %v560, %v670
      %v672 = vpop.f32.mrb[0].mxu0
      %v673 = vadd.f32 %v562, %v672
      %v674 = vpop.f32.mrb[0].mxu0
      %v675 = vadd.f32 %v564, %v674
      %v676 = vpop.f32.mrb[0].mxu0
      %v677 = vadd.f32 %v566, %v676
      %678 = vmatprep.mubr.bf16.mxu0 0
      %679 = vmatmul.mubr.bf16.gmra.mrb[0].mxu0 %v608
      %v680 = vpop.f32.mrb[0].mxu0
      %v681 = vadd.f32 %v570, %v680
      %v682 = vpop.f32.mrb[0].mxu0
      %v683 = vadd.f32 %v572, %v682
      %v684 = vpop.f32.mrb[0].mxu0
      %v685 = vadd.f32 %v574, %v684
      %v686 = vpop.f32.mrb[0].mxu0
      %v687 = vadd.f32 %v576, %v686
      %688 = vdwg.mxu0
      %v689 = vld [vmem:[%s4] sm:$0xff]
      %v690 = vld [vmem:[%s4 + $0x8] sm:$0xff]
      %v691 = vld [vmem:[%s4 + $0x10] sm:$0xff]
      %v692 = vld [vmem:[%s4 + $0x18] sm:$0xff]
      %v693 = vld [vmem:[%s4 + $0x20] sm:$0xff]
      %v694 = vld [vmem:[%s4 + $0x28] sm:$0xff]
      %v695 = vld [vmem:[%s4 + $0x30] sm:$0xff]
      %v696 = vld [vmem:[%s4 + $0x38] sm:$0xff]
      %698 = vset.pattern.permute.xlu0 0
      %699 = vperm.xlu0 %698, %v689
      %v700 = vpop.permute.xlu0 %699
      %703 = vset.pattern.permute.xlu0 0
      %704 = vperm.xlu0 %703, %v690
      %v705 = vpop.permute.xlu0 %704
      %708 = vset.pattern.permute.xlu0 0
      %709 = vperm.xlu0 %708, %v691
      %v710 = vpop.permute.xlu0 %709
      %713 = vset.pattern.permute.xlu0 0
      %714 = vperm.xlu0 %713, %v692
      %v715 = vpop.permute.xlu0 %714
      %718 = vset.pattern.permute.xlu0 0
      %719 = vperm.xlu0 %718, %v693
      %v720 = vpop.permute.xlu0 %719
      %723 = vset.pattern.permute.xlu0 0
      %724 = vperm.xlu0 %723, %v694
      %v725 = vpop.permute.xlu0 %724
      %728 = vset.pattern.permute.xlu0 0
      %729 = vperm.xlu0 %728, %v695
      %v730 = vpop.permute.xlu0 %729
      %733 = vset.pattern.permute.xlu0 0
      %734 = vperm.xlu0 %733, %v696
      %v735 = vpop.permute.xlu0 %734
      %v737 = vadd.f32 %v651, %v700
      %v738 = vadd.f32 %v653, %v700
      %v739 = vadd.f32 %v655, %v705
      %v740 = vadd.f32 %v657, %v705
      %v741 = vadd.f32 %v661, %v710
      %v742 = vadd.f32 %v663, %v710
      %v743 = vadd.f32 %v665, %v715
      %v744 = vadd.f32 %v667, %v715
      %v745 = vadd.f32 %v671, %v720
      %v746 = vadd.f32 %v673, %v720
      %v747 = vadd.f32 %v675, %v725
      %v748 = vadd.f32 %v677, %v725
      %v749 = vadd.f32 %v681, %v730
      %v750 = vadd.f32 %v683, %v730
      %v751 = vadd.f32 %v685, %v735
      %v752 = vadd.f32 %v687, %v735
      %vm753 = vcmp.gt.f32.partialorder %v737, 0.0
      %vm754 = vcmp.gt.f32.partialorder %v738, 0.0
      %vm755 = vcmp.gt.f32.partialorder %v739, 0.0
      %vm756 = vcmp.gt.f32.partialorder %v740, 0.0
      %vm757 = vcmp.gt.f32.partialorder %v741, 0.0
      %vm758 = vcmp.gt.f32.partialorder %v742, 0.0
      %vm759 = vcmp.gt.f32.partialorder %v743, 0.0
      %vm760 = vcmp.gt.f32.partialorder %v744, 0.0
      %vm761 = vcmp.gt.f32.partialorder %v745, 0.0
      %vm762 = vcmp.gt.f32.partialorder %v746, 0.0
      %vm763 = vcmp.gt.f32.partialorder %v747, 0.0
      %vm764 = vcmp.gt.f32.partialorder %v748, 0.0
      %vm765 = vcmp.gt.f32.partialorder %v749, 0.0
      %vm766 = vcmp.gt.f32.partialorder %v750, 0.0
      %vm767 = vcmp.gt.f32.partialorder %v751, 0.0
      %vm768 = vcmp.gt.f32.partialorder %v752, 0.0
      %v769 = vmul.f32 %v737, 0.2
      %v770 = vmul.f32 %v738, 0.2
      %v771 = vmul.f32 %v739, 0.2
      %v772 = vmul.f32 %v740, 0.2
      %v773 = vmul.f32 %v741, 0.2
      %v774 = vmul.f32 %v742, 0.2
      %v775 = vmul.f32 %v743, 0.2
      %v776 = vmul.f32 %v744, 0.2
      %v777 = vmul.f32 %v745, 0.2
      %v778 = vmul.f32 %v746, 0.2
      %v779 = vmul.f32 %v747, 0.2
      %v780 = vmul.f32 %v748, 0.2
      %v781 = vmul.f32 %v749, 0.2
      %v782 = vmul.f32 %v750, 0.2
      %v783 = vmul.f32 %v751, 0.2
      %v784 = vmul.f32 %v752, 0.2
      %v785 = vsel %vm753, %v737, %v769
      %v786 = vsel %vm754, %v738, %v770
      %v787 = vsel %vm755, %v739, %v771
      %v788 = vsel %vm756, %v740, %v772
      %v789 = vsel %vm757, %v741, %v773
      %v790 = vsel %vm758, %v742, %v774
      %v791 = vsel %vm759, %v743, %v775
      %v792 = vsel %vm760, %v744, %v776
      %v793 = vsel %vm761, %v745, %v777
      %v794 = vsel %vm762, %v746, %v778
      %v795 = vsel %vm763, %v747, %v779
      %v796 = vsel %vm764, %v748, %v780
      %v797 = vsel %vm765, %v749, %v781
      %v798 = vsel %vm766, %v750, %v782
      %v799 = vsel %vm767, %v751, %v783
      %v800 = vsel %vm768, %v752, %v784
      %v801 = vpack.c.bf16 %v787, %v785
      %v802 = vpack.c.bf16 %v788, %v786
      %v803 = vpack.c.bf16 %v791, %v789
      %v804 = vpack.c.bf16 %v792, %v790
      %v805 = vpack.c.bf16 %v795, %v793
      %v806 = vpack.c.bf16 %v796, %v794
      %v807 = vpack.c.bf16 %v799, %v797
      %v808 = vpack.c.bf16 %v800, %v798
      %v809 = vld [vmem:[%s5] sm:$0xf]
      %v810 = vld [vmem:[%s5 + $0x4] sm:$0xf]
      %v811 = vld [vmem:[%s5 + $0x8] sm:$0xf]
      %v812 = vld [vmem:[%s5 + $0xc] sm:$0xf]
      %v813 = vld [vmem:[%s5 + $0x10] sm:$0xf]
      %v814 = vld [vmem:[%s5 + $0x14] sm:$0xf]
      %v815 = vld [vmem:[%s5 + $0x18] sm:$0xf]
      %v816 = vld [vmem:[%s5 + $0x1c] sm:$0xf]
      %v817 = vld [vmem:[%s5 + $0x20] sm:$0xf]
      %v818 = vld [vmem:[%s5 + $0x24] sm:$0xf]
      %v819 = vld [vmem:[%s5 + $0x28] sm:$0xf]
      %v820 = vld [vmem:[%s5 + $0x2c] sm:$0xf]
      %v821 = vld [vmem:[%s5 + $0x30] sm:$0xf]
      %v822 = vld [vmem:[%s5 + $0x34] sm:$0xf]
      %v823 = vld [vmem:[%s5 + $0x38] sm:$0xf]
      %v824 = vld [vmem:[%s5 + $0x3c] sm:$0xf]
      %v841 = vunpack.c.l.b16 %v809
      %v842 = vunpack.c.l.b16 %v810
      %v843 = vunpack.c.l.b16 %v811
      %v844 = vunpack.c.l.b16 %v812
      %v845 = vunpack.c.l.b16 %v813
      %v846 = vunpack.c.l.b16 %v814
      %v847 = vunpack.c.l.b16 %v815
      %v848 = vunpack.c.l.b16 %v816
      %v849 = vunpack.c.l.b16 %v817
      %v850 = vunpack.c.l.b16 %v818
      %v851 = vunpack.c.l.b16 %v819
      %v852 = vunpack.c.l.b16 %v820
      %v853 = vunpack.c.l.b16 %v821
      %v854 = vunpack.c.l.b16 %v822
      %v855 = vunpack.c.l.b16 %v823
      %v856 = vunpack.c.l.b16 %v824
      %v857 = vpack.c.b16 %v842, %v841
      %v858 = vpack.c.b16 %v844, %v843
      %v859 = vpack.c.b16 %v846, %v845
      %v860 = vpack.c.b16 %v848, %v847
      %v861 = vpack.c.b16 %v850, %v849
      %v862 = vpack.c.b16 %v852, %v851
      %v863 = vpack.c.b16 %v854, %v853
      %v864 = vpack.c.b16 %v856, %v855
      %vm865 = vcmask 523264
      %v867 = vsel %vm865, %v857, 0
      %v870 = vsel %vm865, %v858, 0
      %v873 = vsel %vm865, %v859, 0
      %v876 = vsel %vm865, %v860, 0
      %v879 = vsel %vm865, %v861, 0
      %v882 = vsel %vm865, %v862, 0
      %v885 = vsel %vm865, %v863, 0
      %v888 = vsel %vm865, %v864, 0
      %890 = vmatprep.subr.bf16.mxu0 %v802
      %891 = vmatpush1.bf16.msra.mxu0 %v801
      %892 = vmatprep.subr.bf16.mxu0 %v804
      %893 = vmatpush1.bf16.msra.mxu0 %v803
      %894 = vmatprep.subr.bf16.mxu0 %v806
      %895 = vmatpush1.bf16.msra.mxu0 %v805
      %896 = vmatprep.subr.bf16.mxu0 %v808
      %897 = vmatpush1.bf16.msra.mxu0 %v807
      %898 = vmatprep.subr.bf16.mxu0 0
      %899 = vmatpush1.bf16.msra.mxu0 0
      %900 = vmatprep.subr.bf16.mxu0 0
      %901 = vmatpush1.bf16.msra.mxu0 0
      %902 = vmatprep.subr.bf16.mxu0 0
      %903 = vmatpush1.bf16.msra.mxu0 0
      %904 = vmatprep.subr.bf16.mxu0 0
      %905 = vmatpush1.bf16.msra.mxu0 0
      %906 = vmatprep.subr.bf16.mxu0 0
      %907 = vmatpush1.bf16.msra.mxu0 0
      %908 = vmatprep.subr.bf16.mxu0 0
      %909 = vmatpush1.bf16.msra.mxu0 0
      %910 = vmatprep.subr.bf16.mxu0 0
      %911 = vmatpush1.bf16.msra.mxu0 0
      %912 = vmatprep.subr.bf16.mxu0 0
      %913 = vmatpush1.bf16.msra.mxu0 0
      %914 = vmatprep.subr.bf16.mxu0 0
      %915 = vmatpush1.bf16.msra.mxu0 0
      %916 = vmatprep.subr.bf16.mxu0 0
      %917 = vmatpush1.bf16.msra.mxu0 0
      %918 = vmatprep.subr.bf16.mxu0 0
      %919 = vmatpush1.bf16.msra.mxu0 0
      %920 = vmatprep.subr.bf16.mxu0 0
      %921 = vmatpush1.bf16.msra.mxu0 0
      %922 = vmatprep.mubr.bf16.mxu0 0
      %923 = vmatmul.mubr.bf16.gmra.mrb[0].mxu0 %v867
      %v924 = vpop.f32.mrb[0].mxu0
      %v925 = vadd.f32 0.0, %v924
      %v926 = vpop.f32.mrb[0].mxu0
      %v927 = vadd.f32 0.0, %v926
      %v928 = vpop.f32.mrb[0].mxu0
      %v929 = vadd.f32 0.0, %v928
      %v930 = vpop.f32.mrb[0].mxu0
      %v931 = vadd.f32 0.0, %v930
      %932 = vmatprep.mubr.bf16.mxu0 0
      %933 = vmatmul.mubr.bf16.gmra.mrb[0].mxu0 %v870
      %v934 = vpop.f32.mrb[0].mxu0
      %v935 = vadd.f32 0.0, %v934
      %v936 = vpop.f32.mrb[0].mxu0
      %v937 = vadd.f32 0.0, %v936
      %v938 = vpop.f32.mrb[0].mxu0
      %v939 = vadd.f32 0.0, %v938
      %v940 = vpop.f32.mrb[0].mxu0
      %v941 = vadd.f32 0.0, %v940
      %942 = vmatprep.mubr.bf16.mxu0 0
      %943 = vmatmul.mubr.bf16.gmra.mrb[0].mxu0 %v873
      %v944 = vpop.f32.mrb[0].mxu0
      %v945 = vadd.f32 0.0, %v944
      %v946 = vpop.f32.mrb[0].mxu0
      %v947 = vadd.f32 0.0, %v946
      %v948 = vpop.f32.mrb[0].mxu0
      %v949 = vadd.f32 0.0, %v948
      %v950 = vpop.f32.mrb[0].mxu0
      %v951 = vadd.f32 0.0, %v950
      %952 = vmatprep.mubr.bf16.mxu0 0
      %953 = vmatmul.mubr.bf16.gmra.mrb[0].mxu0 %v876
      %v954 = vpop.f32.mrb[0].mxu0
      %v955 = vadd.f32 0.0, %v954
      %v956 = vpop.f32.mrb[0].mxu0
      %v957 = vadd.f32 0.0, %v956
      %v958 = vpop.f32.mrb[0].mxu0
      %v959 = vadd.f32 0.0, %v958
      %v960 = vpop.f32.mrb[0].mxu0
      %v961 = vadd.f32 0.0, %v960
      %962 = vmatprep.mubr.bf16.mxu0 0
      %963 = vmatmul.mubr.bf16.gmra.mrb[0].mxu0 %v879
      %v964 = vpop.f32.mrb[0].mxu0
      %v965 = vadd.f32 0.0, %v964
      %v966 = vpop.f32.mrb[0].mxu0
      %v967 = vadd.f32 0.0, %v966
      %v968 = vpop.f32.mrb[0].mxu0
      %v969 = vadd.f32 0.0, %v968
      %v970 = vpop.f32.mrb[0].mxu0
      %v971 = vadd.f32 0.0, %v970
      %972 = vmatprep.mubr.bf16.mxu0 0
      %973 = vmatmul.mubr.bf16.gmra.mrb[0].mxu0 %v882
      %v974 = vpop.f32.mrb[0].mxu0
      %v975 = vadd.f32 0.0, %v974
      %v976 = vpop.f32.mrb[0].mxu0
      %v977 = vadd.f32 0.0, %v976
      %v978 = vpop.f32.mrb[0].mxu0
      %v979 = vadd.f32 0.0, %v978
      %v980 = vpop.f32.mrb[0].mxu0
      %v981 = vadd.f32 0.0, %v980
      %982 = vmatprep.mubr.bf16.mxu0 0
      %983 = vmatmul.mubr.bf16.gmra.mrb[0].mxu0 %v885
      %v984 = vpop.f32.mrb[0].mxu0
      %v985 = vadd.f32 0.0, %v984
      %v986 = vpop.f32.mrb[0].mxu0
      %v987 = vadd.f32 0.0, %v986
      %v988 = vpop.f32.mrb[0].mxu0
      %v989 = vadd.f32 0.0, %v988
      %v990 = vpop.f32.mrb[0].mxu0
      %v991 = vadd.f32 0.0, %v990
      %992 = vmatprep.mubr.bf16.mxu0 0
      %993 = vmatmul.mubr.bf16.gmra.mrb[0].mxu0 %v888
      %v994 = vpop.f32.mrb[0].mxu0
      %v995 = vadd.f32 0.0, %v994
      %v996 = vpop.f32.mrb[0].mxu0
      %v997 = vadd.f32 0.0, %v996
      %v998 = vpop.f32.mrb[0].mxu0
      %v999 = vadd.f32 0.0, %v998
      %v1000 = vpop.f32.mrb[0].mxu0
      %v1001 = vadd.f32 0.0, %v1000
      %1002 = vdwg.mxu0
      // Predicated region
      $region61: #{tpu_custom_call.1} parent=55 // pred_check
        %p1003 = pneg %p390
      $region62: #{tpu_custom_call.1} parent=55 // pred_check_branch
        %1005 = sbr.rel (%p1003) target = $region64
      $region63: #{tpu_custom_call.1} parent=55 // pred_region
        %v1006 = vld [vmem:[#allocation2] sm:$0xff]
        %v1007 = vld [vmem:[#allocation2 + $0x8] sm:$0xff]
        %v1008 = vld [vmem:[#allocation2 + $0x10] sm:$0xff]
        %v1009 = vld [vmem:[#allocation2 + $0x18] sm:$0xff]
        %v1010 = vld [vmem:[#allocation2 + $0x20] sm:$0xff]
        %v1011 = vld [vmem:[#allocation2 + $0x28] sm:$0xff]
        %v1012 = vld [vmem:[#allocation2 + $0x30] sm:$0xff]
        %v1013 = vld [vmem:[#allocation2 + $0x38] sm:$0xff]
        %v1014 = vld [vmem:[#allocation2 + $0x40] sm:$0xff]
        %v1015 = vld [vmem:[#allocation2 + $0x48] sm:$0xff]
        %v1016 = vld [vmem:[#allocation2 + $0x50] sm:$0xff]
        %v1017 = vld [vmem:[#allocation2 + $0x58] sm:$0xff]
        %v1018 = vld [vmem:[#allocation2 + $0x60] sm:$0xff]
        %v1019 = vld [vmem:[#allocation2 + $0x68] sm:$0xff]
        %v1020 = vld [vmem:[#allocation2 + $0x70] sm:$0xff]
        %v1021 = vld [vmem:[#allocation2 + $0x78] sm:$0xff]
        %v1022 = vadd.f32 %v925, %v927
        %1023 = vadd.xlane.f32.xlu0 %v1022
        %v1024 = vpop.xlane.xlu0 %1023
        %v1025 = vadd.f32 %v929, %v931
        %1026 = vadd.xlane.f32.xlu0 %v1025
        %v1027 = vpop.xlane.xlu0 %1026
        %v1028 = vadd.f32 %v935, %v937
        %1029 = vadd.xlane.f32.xlu0 %v1028
        %v1030 = vpop.xlane.xlu0 %1029
        %v1031 = vadd.f32 %v939, %v941
        %1032 = vadd.xlane.f32.xlu0 %v1031
        %v1033 = vpop.xlane.xlu0 %1032
        %v1034 = vadd.f32 %v945, %v947
        %1035 = vadd.xlane.f32.xlu0 %v1034
        %v1036 = vpop.xlane.xlu0 %1035
        %v1037 = vadd.f32 %v949, %v951
        %1038 = vadd.xlane.f32.xlu0 %v1037
        %v1039 = vpop.xlane.xlu0 %1038
        %v1040 = vadd.f32 %v955, %v957
        %1041 = vadd.xlane.f32.xlu0 %v1040
        %v1042 = vpop.xlane.xlu0 %1041
        %v1043 = vadd.f32 %v959, %v961
        %1044 = vadd.xlane.f32.xlu0 %v1043
        %v1045 = vpop.xlane.xlu0 %1044
        %v1046 = vadd.f32 %v965, %v967
        %1047 = vadd.xlane.f32.xlu0 %v1046
        %v1048 = vpop.xlane.xlu0 %1047
        %v1049 = vadd.f32 %v969, %v971
        %1050 = vadd.xlane.f32.xlu0 %v1049
        %v1051 = vpop.xlane.xlu0 %1050
        %v1052 = vadd.f32 %v975, %v977
        %1053 = vadd.xlane.f32.xlu0 %v1052
        %v1054 = vpop.xlane.xlu0 %1053
        %v1055 = vadd.f32 %v979, %v981
        %1056 = vadd.xlane.f32.xlu0 %v1055
        %v1057 = vpop.xlane.xlu0 %1056
        %v1058 = vadd.f32 %v985, %v987
        %1059 = vadd.xlane.f32.xlu0 %v1058
        %v1060 = vpop.xlane.xlu0 %1059
        %v1061 = vadd.f32 %v989, %v991
        %1062 = vadd.xlane.f32.xlu0 %v1061
        %v1063 = vpop.xlane.xlu0 %1062
        %v1064 = vadd.f32 %v995, %v997
        %1065 = vadd.xlane.f32.xlu0 %v1064
        %v1066 = vpop.xlane.xlu0 %1065
        %v1067 = vadd.f32 %v999, %v1001
        %1068 = vadd.xlane.f32.xlu0 %v1067
        %v1069 = vpop.xlane.xlu0 %1068
        %v1070 = vadd.f32 %v1006, %v1024
        %v1071 = vadd.f32 %v1007, %v1027
        %v1072 = vadd.f32 %v1008, %v1030
        %v1073 = vadd.f32 %v1009, %v1033
        %v1074 = vadd.f32 %v1010, %v1036
        %v1075 = vadd.f32 %v1011, %v1039
        %v1076 = vadd.f32 %v1012, %v1042
        %v1077 = vadd.f32 %v1013, %v1045
        %v1078 = vadd.f32 %v1014, %v1048
        %v1079 = vadd.f32 %v1015, %v1051
        %v1080 = vadd.f32 %v1016, %v1054
        %v1081 = vadd.f32 %v1017, %v1057
        %v1082 = vadd.f32 %v1018, %v1060
        %v1083 = vadd.f32 %v1019, %v1063
        %v1084 = vadd.f32 %v1020, %v1066
        %v1085 = vadd.f32 %v1021, %v1069
        %vm1086 = vcmask 7168
        %1087 = vst.msk [vmem:[#allocation2] sm:$0xff] %vm1086, %v1070
        %1088 = vst.msk [vmem:[#allocation2 + $0x8] sm:$0xff] %vm1086, %v1071
        %1089 = vst.msk [vmem:[#allocation2 + $0x10] sm:$0xff] %vm1086, %v1072
        %1090 = vst.msk [vmem:[#allocation2 + $0x18] sm:$0xff] %vm1086, %v1073
        %1091 = vst.msk [vmem:[#allocation2 + $0x20] sm:$0xff] %vm1086, %v1074
        %1092 = vst.msk [vmem:[#allocation2 + $0x28] sm:$0xff] %vm1086, %v1075
        %1093 = vst.msk [vmem:[#allocation2 + $0x30] sm:$0xff] %vm1086, %v1076
        %1094 = vst.msk [vmem:[#allocation2 + $0x38] sm:$0xff] %vm1086, %v1077
        %1095 = vst.msk [vmem:[#allocation2 + $0x40] sm:$0xff] %vm1086, %v1078
        %1096 = vst.msk [vmem:[#allocation2 + $0x48] sm:$0xff] %vm1086, %v1079
        %1097 = vst.msk [vmem:[#allocation2 + $0x50] sm:$0xff] %vm1086, %v1080
        %1098 = vst.msk [vmem:[#allocation2 + $0x58] sm:$0xff] %vm1086, %v1081
        %1099 = vst.msk [vmem:[#allocation2 + $0x60] sm:$0xff] %vm1086, %v1082
        %1100 = vst.msk [vmem:[#allocation2 + $0x68] sm:$0xff] %vm1086, %v1083
        %1101 = vst.msk [vmem:[#allocation2 + $0x70] sm:$0xff] %vm1086, %v1084
        %1102 = vst.msk [vmem:[#allocation2 + $0x78] sm:$0xff] %vm1086, %v1085
        %v1103 = vld [vmem:[#allocation3] sm:$0xff]
        %v1104 = vld [vmem:[#allocation3 + $0x8] sm:$0xff]
        %v1105 = vld [vmem:[#allocation3 + $0x10] sm:$0xff]
        %v1106 = vld [vmem:[#allocation3 + $0x18] sm:$0xff]
        %v1107 = vld [vmem:[#allocation3 + $0x20] sm:$0xff]
        %v1108 = vld [vmem:[#allocation3 + $0x28] sm:$0xff]
        %v1109 = vld [vmem:[#allocation3 + $0x30] sm:$0xff]
        %v1110 = vld [vmem:[#allocation3 + $0x38] sm:$0xff]
        %v1111 = vld [vmem:[#allocation3 + $0x40] sm:$0xff]
        %v1112 = vld [vmem:[#allocation3 + $0x48] sm:$0xff]
        %v1113 = vld [vmem:[#allocation3 + $0x50] sm:$0xff]
        %v1114 = vld [vmem:[#allocation3 + $0x58] sm:$0xff]
        %v1115 = vld [vmem:[#allocation3 + $0x60] sm:$0xff]
        %v1116 = vld [vmem:[#allocation3 + $0x68] sm:$0xff]
        %v1117 = vld [vmem:[#allocation3 + $0x70] sm:$0xff]
        %v1118 = vld [vmem:[#allocation3 + $0x78] sm:$0xff]
        %v1119 = vmul.f32 %v925, %v925
        %v1120 = vmul.f32 %v927, %v927
        %v1121 = vmul.f32 %v929, %v929
        %v1122 = vmul.f32 %v931, %v931
        %v1123 = vmul.f32 %v935, %v935
        %v1124 = vmul.f32 %v937, %v937
        %v1125 = vmul.f32 %v939, %v939
        %v1126 = vmul.f32 %v941, %v941
        %v1127 = vmul.f32 %v945, %v945
        %v1128 = vmul.f32 %v947, %v947
        %v1129 = vmul.f32 %v949, %v949
        %v1130 = vmul.f32 %v951, %v951
        %v1131 = vmul.f32 %v955, %v955
        %v1132 = vmul.f32 %v957, %v957
        %v1133 = vmul.f32 %v959, %v959
        %v1134 = vmul.f32 %v961, %v961
        %v1135 = vmul.f32 %v965, %v965
        %v1136 = vmul.f32 %v967, %v967
        %v1137 = vmul.f32 %v969, %v969
        %v1138 = vmul.f32 %v971, %v971
        %v1139 = vmul.f32 %v975, %v975
        %v1140 = vmul.f32 %v977, %v977
        %v1141 = vmul.f32 %v979, %v979
        %v1142 = vmul.f32 %v981, %v981
        %v1143 = vmul.f32 %v985, %v985
        %v1144 = vmul.f32 %v987, %v987
        %v1145 = vmul.f32 %v989, %v989
        %v1146 = vmul.f32 %v991, %v991
        %v1147 = vmul.f32 %v995, %v995
        %v1148 = vmul.f32 %v997, %v997
        %v1149 = vmul.f32 %v999, %v999
        %v1150 = vmul.f32 %v1001, %v1001
        %v1151 = vadd.f32 %v1119, %v1120
        %1152 = vadd.xlane.f32.xlu0 %v1151
        %v1153 = vpop.xlane.xlu0 %1152
        %v1154 = vadd.f32 %v1121, %v1122
        %1155 = vadd.xlane.f32.xlu0 %v1154
        %v1156 = vpop.xlane.xlu0 %1155
        %v1157 = vadd.f32 %v1123, %v1124
        %1158 = vadd.xlane.f32.xlu0 %v1157
        %v1159 = vpop.xlane.xlu0 %1158
        %v1160 = vadd.f32 %v1125, %v1126
        %1161 = vadd.xlane.f32.xlu0 %v1160
        %v1162 = vpop.xlane.xlu0 %1161
        %v1163 = vadd.f32 %v1127, %v1128
        %1164 = vadd.xlane.f32.xlu0 %v1163
        %v1165 = vpop.xlane.xlu0 %1164
        %v1166 = vadd.f32 %v1129, %v1130
        %1167 = vadd.xlane.f32.xlu0 %v1166
        %v1168 = vpop.xlane.xlu0 %1167
        %v1169 = vadd.f32 %v1131, %v1132
        %1170 = vadd.xlane.f32.xlu0 %v1169
        %v1171 = vpop.xlane.xlu0 %1170
        %v1172 = vadd.f32 %v1133, %v1134
        %1173 = vadd.xlane.f32.xlu0 %v1172
        %v1174 = vpop.xlane.xlu0 %1173
        %v1175 = vadd.f32 %v1135, %v1136
        %1176 = vadd.xlane.f32.xlu0 %v1175
        %v1177 = vpop.xlane.xlu0 %1176
        %v1178 = vadd.f32 %v1137, %v1138
        %1179 = vadd.xlane.f32.xlu0 %v1178
        %v1180 = vpop.xlane.xlu0 %1179
        %v1181 = vadd.f32 %v1139, %v1140
        %1182 = vadd.xlane.f32.xlu0 %v1181
        %v1183 = vpop.xlane.xlu0 %1182
        %v1184 = vadd.f32 %v1141, %v1142
        %1185 = vadd.xlane.f32.xlu0 %v1184
        %v1186 = vpop.xlane.xlu0 %1185
        %v1187 = vadd.f32 %v1143, %v1144
        %1188 = vadd.xlane.f32.xlu0 %v1187
        %v1189 = vpop.xlane.xlu0 %1188
        %v1190 = vadd.f32 %v1145, %v1146
        %1191 = vadd.xlane.f32.xlu0 %v1190
        %v1192 = vpop.xlane.xlu0 %1191
        %v1193 = vadd.f32 %v1147, %v1148
        %1194 = vadd.xlane.f32.xlu0 %v1193
        %v1195 = vpop.xlane.xlu0 %1194
        %v1196 = vadd.f32 %v1149, %v1150
        %1197 = vadd.xlane.f32.xlu0 %v1196
        %v1198 = vpop.xlane.xlu0 %1197
        %v1199 = vadd.f32 %v1103, %v1153
        %v1200 = vadd.f32 %v1104, %v1156
        %v1201 = vadd.f32 %v1105, %v1159
        %v1202 = vadd.f32 %v1106, %v1162
        %v1203 = vadd.f32 %v1107, %v1165
        %v1204 = vadd.f32 %v1108, %v1168
        %v1205 = vadd.f32 %v1109, %v1171
        %v1206 = vadd.f32 %v1110, %v1174
        %v1207 = vadd.f32 %v1111, %v1177
        %v1208 = vadd.f32 %v1112, %v1180
        %v1209 = vadd.f32 %v1113, %v1183
        %v1210 = vadd.f32 %v1114, %v1186
        %v1211 = vadd.f32 %v1115, %v1189
        %v1212 = vadd.f32 %v1116, %v1192
        %v1213 = vadd.f32 %v1117, %v1195
        %v1214 = vadd.f32 %v1118, %v1198
        %1215 = vst.msk [vmem:[#allocation3] sm:$0xff] %vm1086, %v1199
        %1216 = vst.msk [vmem:[#allocation3 + $0x8] sm:$0xff] %vm1086, %v1200
        %1217 = vst.msk [vmem:[#allocation3 + $0x10] sm:$0xff] %vm1086, %v1201
        %1218 = vst.msk [vmem:[#allocation3 + $0x18] sm:$0xff] %vm1086, %v1202
        %1219 = vst.msk [vmem:[#allocation3 + $0x20] sm:$0xff] %vm1086, %v1203
        %1220 = vst.msk [vmem:[#allocation3 + $0x28] sm:$0xff] %vm1086, %v1204
        %1221 = vst.msk [vmem:[#allocation3 + $0x30] sm:$0xff] %vm1086, %v1205
        %1222 = vst.msk [vmem:[#allocation3 + $0x38] sm:$0xff] %vm1086, %v1206
        %1223 = vst.msk [vmem:[#allocation3 + $0x40] sm:$0xff] %vm1086, %v1207
        %1224 = vst.msk [vmem:[#allocation3 + $0x48] sm:$0xff] %vm1086, %v1208
        %1225 = vst.msk [vmem:[#allocation3 + $0x50] sm:$0xff] %vm1086, %v1209
        %1226 = vst.msk [vmem:[#allocation3 + $0x58] sm:$0xff] %vm1086, %v1210
        %1227 = vst.msk [vmem:[#allocation3 + $0x60] sm:$0xff] %vm1086, %v1211
        %1228 = vst.msk [vmem:[#allocation3 + $0x68] sm:$0xff] %vm1086, %v1212
        %1229 = vst.msk [vmem:[#allocation3 + $0x70] sm:$0xff] %vm1086, %v1213
        %1230 = vst.msk [vmem:[#allocation3 + $0x78] sm:$0xff] %vm1086, %v1214
      $region64: #{tpu_custom_call.1} parent=55 // pred_fallthru
        _
      %p1231 = scmp.eq.s32.totalorder %s26, 1
      %p1232 = pnand %p390, %p1231
      %p1233 = pneg %p1232
      %p1234 = pnand %p1233, %p394
      %p1235 = pneg %p1234
      // Predicated region
      $region65: #{tpu_custom_call.1} parent=55 // pred_check
        _
      $region66: #{tpu_custom_call.1} parent=55 // pred_check_branch
        %1237 = sbr.rel (%p1234) target = $region68
      $region67: #{tpu_custom_call.1} parent=55 // pred_region
        %v1238 = vld [vmem:[#allocation2] sm:$0xff]
        %v1239 = vld [vmem:[#allocation2 + $0x8] sm:$0xff]
        %v1240 = vld [vmem:[#allocation2 + $0x10] sm:$0xff]
        %v1241 = vld [vmem:[#allocation2 + $0x18] sm:$0xff]
        %v1242 = vld [vmem:[#allocation2 + $0x20] sm:$0xff]
        %v1243 = vld [vmem:[#allocation2 + $0x28] sm:$0xff]
        %v1244 = vld [vmem:[#allocation2 + $0x30] sm:$0xff]
        %v1245 = vld [vmem:[#allocation2 + $0x38] sm:$0xff]
        %v1246 = vld [vmem:[#allocation2 + $0x40] sm:$0xff]
        %v1247 = vld [vmem:[#allocation2 + $0x48] sm:$0xff]
        %v1248 = vld [vmem:[#allocation2 + $0x50] sm:$0xff]
        %v1249 = vld [vmem:[#allocation2 + $0x58] sm:$0xff]
        %v1250 = vld [vmem:[#allocation2 + $0x60] sm:$0xff]
        %v1251 = vld [vmem:[#allocation2 + $0x68] sm:$0xff]
        %v1252 = vld [vmem:[#allocation2 + $0x70] sm:$0xff]
        %v1253 = vld [vmem:[#allocation2 + $0x78] sm:$0xff]
        %v1254 = vmul.f32 %v1238, 0.001953125
        %v1255 = vmul.f32 %v1239, 0.001953125
        %v1256 = vmul.f32 %v1240, 0.001953125
        %v1257 = vmul.f32 %v1241, 0.001953125
        %v1258 = vmul.f32 %v1242, 0.001953125
        %v1259 = vmul.f32 %v1243, 0.001953125
        %v1260 = vmul.f32 %v1244, 0.001953125
        %v1261 = vmul.f32 %v1245, 0.001953125
        %v1262 = vmul.f32 %v1246, 0.001953125
        %v1263 = vmul.f32 %v1247, 0.001953125
        %v1264 = vmul.f32 %v1248, 0.001953125
        %v1265 = vmul.f32 %v1249, 0.001953125
        %v1266 = vmul.f32 %v1250, 0.001953125
        %v1267 = vmul.f32 %v1251, 0.001953125
        %v1268 = vmul.f32 %v1252, 0.001953125
        %v1269 = vmul.f32 %v1253, 0.001953125
        %v1270 = vld [vmem:[#allocation3] sm:$0xff]
        %v1271 = vld [vmem:[#allocation3 + $0x8] sm:$0xff]
        %v1272 = vld [vmem:[#allocation3 + $0x10] sm:$0xff]
        %v1273 = vld [vmem:[#allocation3 + $0x18] sm:$0xff]
        %v1274 = vld [vmem:[#allocation3 + $0x20] sm:$0xff]
        %v1275 = vld [vmem:[#allocation3 + $0x28] sm:$0xff]
        %v1276 = vld [vmem:[#allocation3 + $0x30] sm:$0xff]
        %v1277 = vld [vmem:[#allocation3 + $0x38] sm:$0xff]
        %v1278 = vld [vmem:[#allocation3 + $0x40] sm:$0xff]
        %v1279 = vld [vmem:[#allocation3 + $0x48] sm:$0xff]
        %v1280 = vld [vmem:[#allocation3 + $0x50] sm:$0xff]
        %v1281 = vld [vmem:[#allocation3 + $0x58] sm:$0xff]
        %v1282 = vld [vmem:[#allocation3 + $0x60] sm:$0xff]
        %v1283 = vld [vmem:[#allocation3 + $0x68] sm:$0xff]
        %v1284 = vld [vmem:[#allocation3 + $0x70] sm:$0xff]
        %v1285 = vld [vmem:[#allocation3 + $0x78] sm:$0xff]
        %v1286 = vmul.f32 %v1270, 0.001953125
        %v1287 = vmul.f32 %v1271, 0.001953125
        %v1288 = vmul.f32 %v1272, 0.001953125
        %v1289 = vmul.f32 %v1273, 0.001953125
        %v1290 = vmul.f32 %v1274, 0.001953125
        %v1291 = vmul.f32 %v1275, 0.001953125
        %v1292 = vmul.f32 %v1276, 0.001953125
        %v1293 = vmul.f32 %v1277, 0.001953125
        %v1294 = vmul.f32 %v1278, 0.001953125
        %v1295 = vmul.f32 %v1279, 0.001953125
        %v1296 = vmul.f32 %v1280, 0.001953125
        %v1297 = vmul.f32 %v1281, 0.001953125
        %v1298 = vmul.f32 %v1282, 0.001953125
        %v1299 = vmul.f32 %v1283, 0.001953125
        %v1300 = vmul.f32 %v1284, 0.001953125
        %v1301 = vmul.f32 %v1285, 0.001953125
        %v1302 = vmul.f32 %v1254, %v1254
        %v1303 = vmul.f32 %v1255, %v1255
        %v1304 = vmul.f32 %v1256, %v1256
        %v1305 = vmul.f32 %v1257, %v1257
        %v1306 = vmul.f32 %v1258, %v1258
        %v1307 = vmul.f32 %v1259, %v1259
        %v1308 = vmul.f32 %v1260, %v1260
        %v1309 = vmul.f32 %v1261, %v1261
        %v1310 = vmul.f32 %v1262, %v1262
        %v1311 = vmul.f32 %v1263, %v1263
        %v1312 = vmul.f32 %v1264, %v1264
        %v1313 = vmul.f32 %v1265, %v1265
        %v1314 = vmul.f32 %v1266, %v1266
        %v1315 = vmul.f32 %v1267, %v1267
        %v1316 = vmul.f32 %v1268, %v1268
        %v1317 = vmul.f32 %v1269, %v1269
        %v1318 = vsub.f32 %v1286, %v1302
        %v1319 = vsub.f32 %v1287, %v1303
        %v1320 = vsub.f32 %v1288, %v1304
        %v1321 = vsub.f32 %v1289, %v1305
        %v1322 = vsub.f32 %v1290, %v1306
        %v1323 = vsub.f32 %v1291, %v1307
        %v1324 = vsub.f32 %v1292, %v1308
        %v1325 = vsub.f32 %v1293, %v1309
        %v1326 = vsub.f32 %v1294, %v1310
        %v1327 = vsub.f32 %v1295, %v1311
        %v1328 = vsub.f32 %v1296, %v1312
        %v1329 = vsub.f32 %v1297, %v1313
        %v1330 = vsub.f32 %v1298, %v1314
        %v1331 = vsub.f32 %v1299, %v1315
        %v1332 = vsub.f32 %v1300, %v1316
        %v1333 = vsub.f32 %v1301, %v1317
        %v1334 = vmax.f32 %v1318, 0.0
        %v1335 = vmax.f32 %v1319, 0.0
        %v1336 = vmax.f32 %v1320, 0.0
        %v1337 = vmax.f32 %v1321, 0.0
        %v1338 = vmax.f32 %v1322, 0.0
        %v1339 = vmax.f32 %v1323, 0.0
        %v1340 = vmax.f32 %v1324, 0.0
        %v1341 = vmax.f32 %v1325, 0.0
        %v1342 = vmax.f32 %v1326, 0.0
        %v1343 = vmax.f32 %v1327, 0.0
        %v1344 = vmax.f32 %v1328, 0.0
        %v1345 = vmax.f32 %v1329, 0.0
        %v1346 = vmax.f32 %v1330, 0.0
        %v1347 = vmax.f32 %v1331, 0.0
        %v1348 = vmax.f32 %v1332, 0.0
        %v1349 = vmax.f32 %v1333, 0.0
        %v1350 = vld [vmem:[%s6] sm:$0xff]
        %v1351 = vld [vmem:[%s6 + $0x8] sm:$0xff]
        %v1352 = vld [vmem:[%s6 + $0x10] sm:$0xff]
        %v1353 = vld [vmem:[%s6 + $0x18] sm:$0xff]
        %v1354 = vld [vmem:[%s6 + $0x20] sm:$0xff]
        %v1355 = vld [vmem:[%s6 + $0x28] sm:$0xff]
        %v1356 = vld [vmem:[%s6 + $0x30] sm:$0xff]
        %v1357 = vld [vmem:[%s6 + $0x38] sm:$0xff]
        %v1358 = vld [vmem:[%s6 + $0x40] sm:$0xff]
        %v1359 = vld [vmem:[%s6 + $0x48] sm:$0xff]
        %v1360 = vld [vmem:[%s6 + $0x50] sm:$0xff]
        %v1361 = vld [vmem:[%s6 + $0x58] sm:$0xff]
        %v1362 = vld [vmem:[%s6 + $0x60] sm:$0xff]
        %v1363 = vld [vmem:[%s6 + $0x68] sm:$0xff]
        %v1364 = vld [vmem:[%s6 + $0x70] sm:$0xff]
        %v1365 = vld [vmem:[%s6 + $0x78] sm:$0xff]
        %v1366 = vadd.f32 %v1334, 1e-05
        %v1367 = vadd.f32 %v1335, 1e-05
        %v1368 = vadd.f32 %v1336, 1e-05
        %v1369 = vadd.f32 %v1337, 1e-05
        %v1370 = vadd.f32 %v1338, 1e-05
        %v1371 = vadd.f32 %v1339, 1e-05
        %v1372 = vadd.f32 %v1340, 1e-05
        %v1373 = vadd.f32 %v1341, 1e-05
        %v1374 = vadd.f32 %v1342, 1e-05
        %v1375 = vadd.f32 %v1343, 1e-05
        %v1376 = vadd.f32 %v1344, 1e-05
        %v1377 = vadd.f32 %v1345, 1e-05
        %v1378 = vadd.f32 %v1346, 1e-05
        %v1379 = vadd.f32 %v1347, 1e-05
        %v1380 = vadd.f32 %v1348, 1e-05
        %v1381 = vadd.f32 %v1349, 1e-05
        %v1382 = vrsqrt.pop %v1366
        %v1383 = vrsqrt.pop %v1367
        %v1384 = vrsqrt.pop %v1368
        %v1385 = vrsqrt.pop %v1369
        %v1386 = vrsqrt.pop %v1370
        %v1387 = vrsqrt.pop %v1371
        %v1388 = vrsqrt.pop %v1372
        %v1389 = vrsqrt.pop %v1373
        %v1390 = vrsqrt.pop %v1374
        %v1391 = vrsqrt.pop %v1375
        %v1392 = vrsqrt.pop %v1376
        %v1393 = vrsqrt.pop %v1377
        %v1394 = vrsqrt.pop %v1378
        %v1395 = vrsqrt.pop %v1379
        %v1396 = vrsqrt.pop %v1380
        %v1397 = vrsqrt.pop %v1381
        %v1398 = vmul.f32 %v1350, %v1382
        %v1399 = vmul.f32 %v1351, %v1383
        %v1400 = vmul.f32 %v1352, %v1384
        %v1401 = vmul.f32 %v1353, %v1385
        %v1402 = vmul.f32 %v1354, %v1386
        %v1403 = vmul.f32 %v1355, %v1387
        %v1404 = vmul.f32 %v1356, %v1388
        %v1405 = vmul.f32 %v1357, %v1389
        %v1406 = vmul.f32 %v1358, %v1390
        %v1407 = vmul.f32 %v1359, %v1391
        %v1408 = vmul.f32 %v1360, %v1392
        %v1409 = vmul.f32 %v1361, %v1393
        %v1410 = vmul.f32 %v1362, %v1394
        %v1411 = vmul.f32 %v1363, %v1395
        %v1412 = vmul.f32 %v1364, %v1396
        %v1413 = vmul.f32 %v1365, %v1397
        %vm1414 = vcmask 7168
        %1415 = vst.msk [vmem:[#allocation4] sm:$0xff] %vm1414, %v1398
        %1416 = vst.msk [vmem:[#allocation4 + $0x8] sm:$0xff] %vm1414, %v1399
        %1417 = vst.msk [vmem:[#allocation4 + $0x10] sm:$0xff] %vm1414, %v1400
        %1418 = vst.msk [vmem:[#allocation4 + $0x18] sm:$0xff] %vm1414, %v1401
        %1419 = vst.msk [vmem:[#allocation4 + $0x20] sm:$0xff] %vm1414, %v1402
        %1420 = vst.msk [vmem:[#allocation4 + $0x28] sm:$0xff] %vm1414, %v1403
        %1421 = vst.msk [vmem:[#allocation4 + $0x30] sm:$0xff] %vm1414, %v1404
        %1422 = vst.msk [vmem:[#allocation4 + $0x38] sm:$0xff] %vm1414, %v1405
        %1423 = vst.msk [vmem:[#allocation4 + $0x40] sm:$0xff] %vm1414, %v1406
        %1424 = vst.msk [vmem:[#allocation4 + $0x48] sm:$0xff] %vm1414, %v1407
        %1425 = vst.msk [vmem:[#allocation4 + $0x50] sm:$0xff] %vm1414, %v1408
        %1426 = vst.msk [vmem:[#allocation4 + $0x58] sm:$0xff] %vm1414, %v1409
        %1427 = vst.msk [vmem:[#allocation4 + $0x60] sm:$0xff] %vm1414, %v1410
        %1428 = vst.msk [vmem:[#allocation4 + $0x68] sm:$0xff] %vm1414, %v1411
        %1429 = vst.msk [vmem:[#allocation4 + $0x70] sm:$0xff] %vm1414, %v1412
        %1430 = vst.msk [vmem:[#allocation4 + $0x78] sm:$0xff] %vm1414, %v1413
        %v1431 = vld [vmem:[%s7] sm:$0xff]
        %v1432 = vld [vmem:[%s7 + $0x8] sm:$0xff]
        %v1433 = vld [vmem:[%s7 + $0x10] sm:$0xff]
        %v1434 = vld [vmem:[%s7 + $0x18] sm:$0xff]
        %v1435 = vld [vmem:[%s7 + $0x20] sm:$0xff]
        %v1436 = vld [vmem:[%s7 + $0x28] sm:$0xff]
        %v1437 = vld [vmem:[%s7 + $0x30] sm:$0xff]
        %v1438 = vld [vmem:[%s7 + $0x38] sm:$0xff]
        %v1439 = vld [vmem:[%s7 + $0x40] sm:$0xff]
        %v1440 = vld [vmem:[%s7 + $0x48] sm:$0xff]
        %v1441 = vld [vmem:[%s7 + $0x50] sm:$0xff]
        %v1442 = vld [vmem:[%s7 + $0x58] sm:$0xff]
        %v1443 = vld [vmem:[%s7 + $0x60] sm:$0xff]
        %v1444 = vld [vmem:[%s7 + $0x68] sm:$0xff]
        %v1445 = vld [vmem:[%s7 + $0x70] sm:$0xff]
        %v1446 = vld [vmem:[%s7 + $0x78] sm:$0xff]
        %v1447 = vmul.f32 %v1254, %v1398
        %v1448 = vmul.f32 %v1255, %v1399
        %v1449 = vmul.f32 %v1256, %v1400
        %v1450 = vmul.f32 %v1257, %v1401
        %v1451 = vmul.f32 %v1258, %v1402
        %v1452 = vmul.f32 %v1259, %v1403
        %v1453 = vmul.f32 %v1260, %v1404
        %v1454 = vmul.f32 %v1261, %v1405
        %v1455 = vmul.f32 %v1262, %v1406
        %v1456 = vmul.f32 %v1263, %v1407
        %v1457 = vmul.f32 %v1264, %v1408
        %v1458 = vmul.f32 %v1265, %v1409
        %v1459 = vmul.f32 %v1266, %v1410
        %v1460 = vmul.f32 %v1267, %v1411
        %v1461 = vmul.f32 %v1268, %v1412
        %v1462 = vmul.f32 %v1269, %v1413
        %v1463 = vsub.f32 %v1431, %v1447
        %v1464 = vsub.f32 %v1432, %v1448
        %v1465 = vsub.f32 %v1433, %v1449
        %v1466 = vsub.f32 %v1434, %v1450
        %v1467 = vsub.f32 %v1435, %v1451
        %v1468 = vsub.f32 %v1436, %v1452
        %v1469 = vsub.f32 %v1437, %v1453
        %v1470 = vsub.f32 %v1438, %v1454
        %v1471 = vsub.f32 %v1439, %v1455
        %v1472 = vsub.f32 %v1440, %v1456
        %v1473 = vsub.f32 %v1441, %v1457
        %v1474 = vsub.f32 %v1442, %v1458
        %v1475 = vsub.f32 %v1443, %v1459
        %v1476 = vsub.f32 %v1444, %v1460
        %v1477 = vsub.f32 %v1445, %v1461
        %v1478 = vsub.f32 %v1446, %v1462
        %1479 = vst.msk [vmem:[#allocation5] sm:$0xff] %vm1414, %v1463
        %1480 = vst.msk [vmem:[#allocation5 + $0x8] sm:$0xff] %vm1414, %v1464
        %1481 = vst.msk [vmem:[#allocation5 + $0x10] sm:$0xff] %vm1414, %v1465
        %1482 = vst.msk [vmem:[#allocation5 + $0x18] sm:$0xff] %vm1414, %v1466
        %1483 = vst.msk [vmem:[#allocation5 + $0x20] sm:$0xff] %vm1414, %v1467
        %1484 = vst.msk [vmem:[#allocation5 + $0x28] sm:$0xff] %vm1414, %v1468
        %1485 = vst.msk [vmem:[#allocation5 + $0x30] sm:$0xff] %vm1414, %v1469
        %1486 = vst.msk [vmem:[#allocation5 + $0x38] sm:$0xff] %vm1414, %v1470
        %1487 = vst.msk [vmem:[#allocation5 + $0x40] sm:$0xff] %vm1414, %v1471
        %1488 = vst.msk [vmem:[#allocation5 + $0x48] sm:$0xff] %vm1414, %v1472
        %1489 = vst.msk [vmem:[#allocation5 + $0x50] sm:$0xff] %vm1414, %v1473
        %1490 = vst.msk [vmem:[#allocation5 + $0x58] sm:$0xff] %vm1414, %v1474
        %1491 = vst.msk [vmem:[#allocation5 + $0x60] sm:$0xff] %vm1414, %v1475
        %1492 = vst.msk [vmem:[#allocation5 + $0x68] sm:$0xff] %vm1414, %v1476
        %1493 = vst.msk [vmem:[#allocation5 + $0x70] sm:$0xff] %vm1414, %v1477
        %1494 = vst.msk [vmem:[#allocation5 + $0x78] sm:$0xff] %vm1414, %v1478
      $region68: #{tpu_custom_call.1} parent=55 // pred_fallthru
        _
      %p1495 = scmp.eq.s32.totalorder %s25, 1
      // Predicated region
      $region69: #{tpu_custom_call.1} parent=55 // pred_check
        %p1496 = pneg %p1495
      $region70: #{tpu_custom_call.1} parent=55 // pred_check_branch
        %1498 = sbr.rel (%p1496) target = $region72
      $region71: #{tpu_custom_call.1} parent=55 // pred_region
        %v1499 = vld [vmem:[#allocation4] sm:$0xff]
        %v1500 = vld [vmem:[#allocation4 + $0x8] sm:$0xff]
        %v1501 = vld [vmem:[#allocation4 + $0x10] sm:$0xff]
        %v1502 = vld [vmem:[#allocation4 + $0x18] sm:$0xff]
        %v1503 = vld [vmem:[#allocation4 + $0x20] sm:$0xff]
        %v1504 = vld [vmem:[#allocation4 + $0x28] sm:$0xff]
        %v1505 = vld [vmem:[#allocation4 + $0x30] sm:$0xff]
        %v1506 = vld [vmem:[#allocation4 + $0x38] sm:$0xff]
        %v1507 = vld [vmem:[#allocation4 + $0x40] sm:$0xff]
        %v1508 = vld [vmem:[#allocation4 + $0x48] sm:$0xff]
        %v1509 = vld [vmem:[#allocation4 + $0x50] sm:$0xff]
        %v1510 = vld [vmem:[#allocation4 + $0x58] sm:$0xff]
        %v1511 = vld [vmem:[#allocation4 + $0x60] sm:$0xff]
        %v1512 = vld [vmem:[#allocation4 + $0x68] sm:$0xff]
        %v1513 = vld [vmem:[#allocation4 + $0x70] sm:$0xff]
        %v1514 = vld [vmem:[#allocation4 + $0x78] sm:$0xff]
        %1516 = vset.pattern.permute.xlu0 0
        %1517 = vperm.xlu0 %1516, %v1499
        %v1518 = vpop.permute.xlu0 %1517
        %1521 = vset.pattern.permute.xlu0 0
        %1522 = vperm.xlu0 %1521, %v1500
        %v1523 = vpop.permute.xlu0 %1522
        %1526 = vset.pattern.permute.xlu0 0
        %1527 = vperm.xlu0 %1526, %v1501
        %v1528 = vpop.permute.xlu0 %1527
        %1531 = vset.pattern.permute.xlu0 0
        %1532 = vperm.xlu0 %1531, %v1502
        %v1533 = vpop.permute.xlu0 %1532
        %1536 = vset.pattern.permute.xlu0 0
        %1537 = vperm.xlu0 %1536, %v1503
        %v1538 = vpop.permute.xlu0 %1537
        %1541 = vset.pattern.permute.xlu0 0
        %1542 = vperm.xlu0 %1541, %v1504
        %v1543 = vpop.permute.xlu0 %1542
        %1546 = vset.pattern.permute.xlu0 0
        %1547 = vperm.xlu0 %1546, %v1505
        %v1548 = vpop.permute.xlu0 %1547
        %1551 = vset.pattern.permute.xlu0 0
        %1552 = vperm.xlu0 %1551, %v1506
        %v1553 = vpop.permute.xlu0 %1552
        %1556 = vset.pattern.permute.xlu0 0
        %1557 = vperm.xlu0 %1556, %v1507
        %v1558 = vpop.permute.xlu0 %1557
        %1561 = vset.pattern.permute.xlu0 0
        %1562 = vperm.xlu0 %1561, %v1508
        %v1563 = vpop.permute.xlu0 %1562
        %1566 = vset.pattern.permute.xlu0 0
        %1567 = vperm.xlu0 %1566, %v1509
        %v1568 = vpop.permute.xlu0 %1567
        %1571 = vset.pattern.permute.xlu0 0
        %1572 = vperm.xlu0 %1571, %v1510
        %v1573 = vpop.permute.xlu0 %1572
        %1576 = vset.pattern.permute.xlu0 0
        %1577 = vperm.xlu0 %1576, %v1511
        %v1578 = vpop.permute.xlu0 %1577
        %1581 = vset.pattern.permute.xlu0 0
        %1582 = vperm.xlu0 %1581, %v1512
        %v1583 = vpop.permute.xlu0 %1582
        %1586 = vset.pattern.permute.xlu0 0
        %1587 = vperm.xlu0 %1586, %v1513
        %v1588 = vpop.permute.xlu0 %1587
        %1591 = vset.pattern.permute.xlu0 0
        %1592 = vperm.xlu0 %1591, %v1514
        %v1593 = vpop.permute.xlu0 %1592
        %v1595 = vmul.f32 %v925, %v1518
        %v1596 = vmul.f32 %v927, %v1518
        %v1597 = vmul.f32 %v929, %v1523
        %v1598 = vmul.f32 %v931, %v1523
        %v1599 = vmul.f32 %v935, %v1528
        %v1600 = vmul.f32 %v937, %v1528
        %v1601 = vmul.f32 %v939, %v1533
        %v1602 = vmul.f32 %v941, %v1533
        %v1603 = vmul.f32 %v945, %v1538
        %v1604 = vmul.f32 %v947, %v1538
        %v1605 = vmul.f32 %v949, %v1543
        %v1606 = vmul.f32 %v951, %v1543
        %v1607 = vmul.f32 %v955, %v1548
        %v1608 = vmul.f32 %v957, %v1548
        %v1609 = vmul.f32 %v959, %v1553
        %v1610 = vmul.f32 %v961, %v1553
        %v1611 = vmul.f32 %v965, %v1558
        %v1612 = vmul.f32 %v967, %v1558
        %v1613 = vmul.f32 %v969, %v1563
        %v1614 = vmul.f32 %v971, %v1563
        %v1615 = vmul.f32 %v975, %v1568
        %v1616 = vmul.f32 %v977, %v1568
        %v1617 = vmul.f32 %v979, %v1573
        %v1618 = vmul.f32 %v981, %v1573
        %v1619 = vmul.f32 %v985, %v1578
        %v1620 = vmul.f32 %v987, %v1578
        %v1621 = vmul.f32 %v989, %v1583
        %v1622 = vmul.f32 %v991, %v1583
        %v1623 = vmul.f32 %v995, %v1588
        %v1624 = vmul.f32 %v997, %v1588
        %v1625 = vmul.f32 %v999, %v1593
        %v1626 = vmul.f32 %v1001, %v1593
        %v1627 = vld [vmem:[#allocation5] sm:$0xff]
        %v1628 = vld [vmem:[#allocation5 + $0x8] sm:$0xff]
        %v1629 = vld [vmem:[#allocation5 + $0x10] sm:$0xff]
        %v1630 = vld [vmem:[#allocation5 + $0x18] sm:$0xff]
        %v1631 = vld [vmem:[#allocation5 + $0x20] sm:$0xff]
        %v1632 = vld [vmem:[#allocation5 + $0x28] sm:$0xff]
        %v1633 = vld [vmem:[#allocation5 + $0x30] sm:$0xff]
        %v1634 = vld [vmem:[#allocation5 + $0x38] sm:$0xff]
        %v1635 = vld [vmem:[#allocation5 + $0x40] sm:$0xff]
        %v1636 = vld [vmem:[#allocation5 + $0x48] sm:$0xff]
        %v1637 = vld [vmem:[#allocation5 + $0x50] sm:$0xff]
        %v1638 = vld [vmem:[#allocation5 + $0x58] sm:$0xff]
        %v1639 = vld [vmem:[#allocation5 + $0x60] sm:$0xff]
        %v1640 = vld [vmem:[#allocation5 + $0x68] sm:$0xff]
        %v1641 = vld [vmem:[#allocation5 + $0x70] sm:$0xff]
        %v1642 = vld [vmem:[#allocation5 + $0x78] sm:$0xff]
        %1644 = vset.pattern.permute.xlu0 0
        %1645 = vperm.xlu0 %1644, %v1627
        %v1646 = vpop.permute.xlu0 %1645
        %1649 = vset.pattern.permute.xlu0 0
        %1650 = vperm.xlu0 %1649, %v1628
        %v1651 = vpop.permute.xlu0 %1650
        %1654 = vset.pattern.permute.xlu0 0
        %1655 = vperm.xlu0 %1654, %v1629
        %v1656 = vpop.permute.xlu0 %1655
        %1659 = vset.pattern.permute.xlu0 0
        %1660 = vperm.xlu0 %1659, %v1630
        %v1661 = vpop.permute.xlu0 %1660
        %1664 = vset.pattern.permute.xlu0 0
        %1665 = vperm.xlu0 %1664, %v1631
        %v1666 = vpop.permute.xlu0 %1665
        %1669 = vset.pattern.permute.xlu0 0
        %1670 = vperm.xlu0 %1669, %v1632
        %v1671 = vpop.permute.xlu0 %1670
        %1674 = vset.pattern.permute.xlu0 0
        %1675 = vperm.xlu0 %1674, %v1633
        %v1676 = vpop.permute.xlu0 %1675
        %1679 = vset.pattern.permute.xlu0 0
        %1680 = vperm.xlu0 %1679, %v1634
        %v1681 = vpop.permute.xlu0 %1680
        %1684 = vset.pattern.permute.xlu0 0
        %1685 = vperm.xlu0 %1684, %v1635
        %v1686 = vpop.permute.xlu0 %1685
        %1689 = vset.pattern.permute.xlu0 0
        %1690 = vperm.xlu0 %1689, %v1636
        %v1691 = vpop.permute.xlu0 %1690
        %1694 = vset.pattern.permute.xlu0 0
        %1695 = vperm.xlu0 %1694, %v1637
        %v1696 = vpop.permute.xlu0 %1695
        %1699 = vset.pattern.permute.xlu0 0
        %1700 = vperm.xlu0 %1699, %v1638
        %v1701 = vpop.permute.xlu0 %1700
        %1704 = vset.pattern.permute.xlu0 0
        %1705 = vperm.xlu0 %1704, %v1639
        %v1706 = vpop.permute.xlu0 %1705
        %1709 = vset.pattern.permute.xlu0 0
        %1710 = vperm.xlu0 %1709, %v1640
        %v1711 = vpop.permute.xlu0 %1710
        %1714 = vset.pattern.permute.xlu0 0
        %1715 = vperm.xlu0 %1714, %v1641
        %v1716 = vpop.permute.xlu0 %1715
        %1719 = vset.pattern.permute.xlu0 0
        %1720 = vperm.xlu0 %1719, %v1642
        %v1721 = vpop.permute.xlu0 %1720
        %v1723 = vadd.f32 %v1595, %v1646
        %v1724 = vadd.f32 %v1596, %v1646
        %v1725 = vadd.f32 %v1597, %v1651
        %v1726 = vadd.f32 %v1598, %v1651
        %v1727 = vadd.f32 %v1599, %v1656
        %v1728 = vadd.f32 %v1600, %v1656
        %v1729 = vadd.f32 %v1601, %v1661
        %v1730 = vadd.f32 %v1602, %v1661
        %v1731 = vadd.f32 %v1603, %v1666
        %v1732 = vadd.f32 %v1604, %v1666
        %v1733 = vadd.f32 %v1605, %v1671
        %v1734 = vadd.f32 %v1606, %v1671
        %v1735 = vadd.f32 %v1607, %v1676
        %v1736 = vadd.f32 %v1608, %v1676
        %v1737 = vadd.f32 %v1609, %v1681
        %v1738 = vadd.f32 %v1610, %v1681
        %v1739 = vadd.f32 %v1611, %v1686
        %v1740 = vadd.f32 %v1612, %v1686
        %v1741 = vadd.f32 %v1613, %v1691
        %v1742 = vadd.f32 %v1614, %v1691
        %v1743 = vadd.f32 %v1615, %v1696
        %v1744 = vadd.f32 %v1616, %v1696
        %v1745 = vadd.f32 %v1617, %v1701
        %v1746 = vadd.f32 %v1618, %v1701
        %v1747 = vadd.f32 %v1619, %v1706
        %v1748 = vadd.f32 %v1620, %v1706
        %v1749 = vadd.f32 %v1621, %v1711
        %v1750 = vadd.f32 %v1622, %v1711
        %v1751 = vadd.f32 %v1623, %v1716
        %v1752 = vadd.f32 %v1624, %v1716
        %v1753 = vadd.f32 %v1625, %v1721
        %v1754 = vadd.f32 %v1626, %v1721
        %vm1755 = vcmp.gt.f32.partialorder %v1723, 0.0
        %vm1756 = vcmp.gt.f32.partialorder %v1724, 0.0
        %vm1757 = vcmp.gt.f32.partialorder %v1725, 0.0
        %vm1758 = vcmp.gt.f32.partialorder %v1726, 0.0
        %vm1759 = vcmp.gt.f32.partialorder %v1727, 0.0
        %vm1760 = vcmp.gt.f32.partialorder %v1728, 0.0
        %vm1761 = vcmp.gt.f32.partialorder %v1729, 0.0
        %vm1762 = vcmp.gt.f32.partialorder %v1730, 0.0
        %vm1763 = vcmp.gt.f32.partialorder %v1731, 0.0
        %vm1764 = vcmp.gt.f32.partialorder %v1732, 0.0
        %vm1765 = vcmp.gt.f32.partialorder %v1733, 0.0
        %vm1766 = vcmp.gt.f32.partialorder %v1734, 0.0
        %vm1767 = vcmp.gt.f32.partialorder %v1735, 0.0
        %vm1768 = vcmp.gt.f32.partialorder %v1736, 0.0
        %vm1769 = vcmp.gt.f32.partialorder %v1737, 0.0
        %vm1770 = vcmp.gt.f32.partialorder %v1738, 0.0
        %vm1771 = vcmp.gt.f32.partialorder %v1739, 0.0
        %vm1772 = vcmp.gt.f32.partialorder %v1740, 0.0
        %vm1773 = vcmp.gt.f32.partialorder %v1741, 0.0
        %vm1774 = vcmp.gt.f32.partialorder %v1742, 0.0
        %vm1775 = vcmp.gt.f32.partialorder %v1743, 0.0
        %vm1776 = vcmp.gt.f32.partialorder %v1744, 0.0
        %vm1777 = vcmp.gt.f32.partialorder %v1745, 0.0
        %vm1778 = vcmp.gt.f32.partialorder %v1746, 0.0
        %vm1779 = vcmp.gt.f32.partialorder %v1747, 0.0
        %vm1780 = vcmp.gt.f32.partialorder %v1748, 0.0
        %vm1781 = vcmp.gt.f32.partialorder %v1749, 0.0
        %vm1782 = vcmp.gt.f32.partialorder %v1750, 0.0
        %vm1783 = vcmp.gt.f32.partialorder %v1751, 0.0
        %vm1784 = vcmp.gt.f32.partialorder %v1752, 0.0
        %vm1785 = vcmp.gt.f32.partialorder %v1753, 0.0
        %vm1786 = vcmp.gt.f32.partialorder %v1754, 0.0
        %v1787 = vmul.f32 %v1723, 0.2
        %v1788 = vmul.f32 %v1724, 0.2
        %v1789 = vmul.f32 %v1725, 0.2
        %v1790 = vmul.f32 %v1726, 0.2
        %v1791 = vmul.f32 %v1727, 0.2
        %v1792 = vmul.f32 %v1728, 0.2
        %v1793 = vmul.f32 %v1729, 0.2
        %v1794 = vmul.f32 %v1730, 0.2
        %v1795 = vmul.f32 %v1731, 0.2
        %v1796 = vmul.f32 %v1732, 0.2
        %v1797 = vmul.f32 %v1733, 0.2
        %v1798 = vmul.f32 %v1734, 0.2
        %v1799 = vmul.f32 %v1735, 0.2
        %v1800 = vmul.f32 %v1736, 0.2
        %v1801 = vmul.f32 %v1737, 0.2
        %v1802 = vmul.f32 %v1738, 0.2
        %v1803 = vmul.f32 %v1739, 0.2
        %v1804 = vmul.f32 %v1740, 0.2
        %v1805 = vmul.f32 %v1741, 0.2
        %v1806 = vmul.f32 %v1742, 0.2
        %v1807 = vmul.f32 %v1743, 0.2
        %v1808 = vmul.f32 %v1744, 0.2
        %v1809 = vmul.f32 %v1745, 0.2
        %v1810 = vmul.f32 %v1746, 0.2
        %v1811 = vmul.f32 %v1747, 0.2
        %v1812 = vmul.f32 %v1748, 0.2
        %v1813 = vmul.f32 %v1749, 0.2
        %v1814 = vmul.f32 %v1750, 0.2
        %v1815 = vmul.f32 %v1751, 0.2
        %v1816 = vmul.f32 %v1752, 0.2
        %v1817 = vmul.f32 %v1753, 0.2
        %v1818 = vmul.f32 %v1754, 0.2
        %v1819 = vsel %vm1755, %v1723, %v1787
        %v1820 = vsel %vm1756, %v1724, %v1788
        %v1821 = vsel %vm1757, %v1725, %v1789
        %v1822 = vsel %vm1758, %v1726, %v1790
        %v1823 = vsel %vm1759, %v1727, %v1791
        %v1824 = vsel %vm1760, %v1728, %v1792
        %v1825 = vsel %vm1761, %v1729, %v1793
        %v1826 = vsel %vm1762, %v1730, %v1794
        %v1827 = vsel %vm1763, %v1731, %v1795
        %v1828 = vsel %vm1764, %v1732, %v1796
        %v1829 = vsel %vm1765, %v1733, %v1797
        %v1830 = vsel %vm1766, %v1734, %v1798
        %v1831 = vsel %vm1767, %v1735, %v1799
        %v1832 = vsel %vm1768, %v1736, %v1800
        %v1833 = vsel %vm1769, %v1737, %v1801
        %v1834 = vsel %vm1770, %v1738, %v1802
        %v1835 = vsel %vm1771, %v1739, %v1803
        %v1836 = vsel %vm1772, %v1740, %v1804
        %v1837 = vsel %vm1773, %v1741, %v1805
        %v1838 = vsel %vm1774, %v1742, %v1806
        %v1839 = vsel %vm1775, %v1743, %v1807
        %v1840 = vsel %vm1776, %v1744, %v1808
        %v1841 = vsel %vm1777, %v1745, %v1809
        %v1842 = vsel %vm1778, %v1746, %v1810
        %v1843 = vsel %vm1779, %v1747, %v1811
        %v1844 = vsel %vm1780, %v1748, %v1812
        %v1845 = vsel %vm1781, %v1749, %v1813
        %v1846 = vsel %vm1782, %v1750, %v1814
        %v1847 = vsel %vm1783, %v1751, %v1815
        %v1848 = vsel %vm1784, %v1752, %v1816
        %v1849 = vsel %vm1785, %v1753, %v1817
        %v1850 = vsel %vm1786, %v1754, %v1818
        %v1851 = vld [vmem:[%s8] sm:$0xff]
        %v1852 = vld [vmem:[%s8 + $0x8] sm:$0xff]
        %v1853 = vld [vmem:[%s8 + $0x10] sm:$0xff]
        %v1854 = vld [vmem:[%s8 + $0x18] sm:$0xff]
        %v1855 = vld [vmem:[%s8 + $0x20] sm:$0xff]
        %v1856 = vld [vmem:[%s8 + $0x28] sm:$0xff]
        %v1857 = vld [vmem:[%s8 + $0x30] sm:$0xff]
        %v1858 = vld [vmem:[%s8 + $0x38] sm:$0xff]
        %v1859 = vld [vmem:[%s8 + $0x40] sm:$0xff]
        %v1860 = vld [vmem:[%s8 + $0x48] sm:$0xff]
        %v1861 = vld [vmem:[%s8 + $0x50] sm:$0xff]
        %v1862 = vld [vmem:[%s8 + $0x58] sm:$0xff]
        %v1863 = vld [vmem:[%s8 + $0x60] sm:$0xff]
        %v1864 = vld [vmem:[%s8 + $0x68] sm:$0xff]
        %v1865 = vld [vmem:[%s8 + $0x70] sm:$0xff]
        %v1866 = vld [vmem:[%s8 + $0x78] sm:$0xff]
        %1868 = vset.pattern.permute.xlu0 0
        %1869 = vperm.xlu0 %1868, %v1851
        %v1870 = vpop.permute.xlu0 %1869
        %1873 = vset.pattern.permute.xlu0 0
        %1874 = vperm.xlu0 %1873, %v1852
        %v1875 = vpop.permute.xlu0 %1874
        %1878 = vset.pattern.permute.xlu0 0
        %1879 = vperm.xlu0 %1878, %v1853
        %v1880 = vpop.permute.xlu0 %1879
        %1883 = vset.pattern.permute.xlu0 0
        %1884 = vperm.xlu0 %1883, %v1854
        %v1885 = vpop.permute.xlu0 %1884
        %1888 = vset.pattern.permute.xlu0 0
        %1889 = vperm.xlu0 %1888, %v1855
        %v1890 = vpop.permute.xlu0 %1889
        %1893 = vset.pattern.permute.xlu0 0
        %1894 = vperm.xlu0 %1893, %v1856
        %v1895 = vpop.permute.xlu0 %1894
        %1898 = vset.pattern.permute.xlu0 0
        %1899 = vperm.xlu0 %1898, %v1857
        %v1900 = vpop.permute.xlu0 %1899
        %1903 = vset.pattern.permute.xlu0 0
        %1904 = vperm.xlu0 %1903, %v1858
        %v1905 = vpop.permute.xlu0 %1904
        %1908 = vset.pattern.permute.xlu0 0
        %1909 = vperm.xlu0 %1908, %v1859
        %v1910 = vpop.permute.xlu0 %1909
        %1913 = vset.pattern.permute.xlu0 0
        %1914 = vperm.xlu0 %1913, %v1860
        %v1915 = vpop.permute.xlu0 %1914
        %1918 = vset.pattern.permute.xlu0 0
        %1919 = vperm.xlu0 %1918, %v1861
        %v1920 = vpop.permute.xlu0 %1919
        %1923 = vset.pattern.permute.xlu0 0
        %1924 = vperm.xlu0 %1923, %v1862
        %v1925 = vpop.permute.xlu0 %1924
        %1928 = vset.pattern.permute.xlu0 0
        %1929 = vperm.xlu0 %1928, %v1863
        %v1930 = vpop.permute.xlu0 %1929
        %1933 = vset.pattern.permute.xlu0 0
        %1934 = vperm.xlu0 %1933, %v1864
        %v1935 = vpop.permute.xlu0 %1934
        %1938 = vset.pattern.permute.xlu0 0
        %1939 = vperm.xlu0 %1938, %v1865
        %v1940 = vpop.permute.xlu0 %1939
        %1943 = vset.pattern.permute.xlu0 0
        %1944 = vperm.xlu0 %1943, %v1866
        %v1945 = vpop.permute.xlu0 %1944
        %v1947 = vmul.f32 %v1819, %v1870
        %v1948 = vmul.f32 %v1820, %v1870
        %v1949 = vmul.f32 %v1821, %v1875
        %v1950 = vmul.f32 %v1822, %v1875
        %v1951 = vmul.f32 %v1823, %v1880
        %v1952 = vmul.f32 %v1824, %v1880
        %v1953 = vmul.f32 %v1825, %v1885
        %v1954 = vmul.f32 %v1826, %v1885
        %v1955 = vmul.f32 %v1827, %v1890
        %v1956 = vmul.f32 %v1828, %v1890
        %v1957 = vmul.f32 %v1829, %v1895
        %v1958 = vmul.f32 %v1830, %v1895
        %v1959 = vmul.f32 %v1831, %v1900
        %v1960 = vmul.f32 %v1832, %v1900
        %v1961 = vmul.f32 %v1833, %v1905
        %v1962 = vmul.f32 %v1834, %v1905
        %v1963 = vmul.f32 %v1835, %v1910
        %v1964 = vmul.f32 %v1836, %v1910
        %v1965 = vmul.f32 %v1837, %v1915
        %v1966 = vmul.f32 %v1838, %v1915
        %v1967 = vmul.f32 %v1839, %v1920
        %v1968 = vmul.f32 %v1840, %v1920
        %v1969 = vmul.f32 %v1841, %v1925
        %v1970 = vmul.f32 %v1842, %v1925
        %v1971 = vmul.f32 %v1843, %v1930
        %v1972 = vmul.f32 %v1844, %v1930
        %v1973 = vmul.f32 %v1845, %v1935
        %v1974 = vmul.f32 %v1846, %v1935
        %v1975 = vmul.f32 %v1847, %v1940
        %v1976 = vmul.f32 %v1848, %v1940
        %v1977 = vmul.f32 %v1849, %v1945
        %v1978 = vmul.f32 %v1850, %v1945
        %v1979 = vadd.f32 %v1947, %v1949
        %v1980 = vadd.f32 %v1979, %v1951
        %v1981 = vadd.f32 %v1980, %v1953
        %v1982 = vadd.f32 %v1981, %v1955
        %v1983 = vadd.f32 %v1982, %v1957
        %v1984 = vadd.f32 %v1983, %v1959
        %v1985 = vadd.f32 %v1984, %v1961
        %v1986 = vadd.f32 %v1985, %v1963
        %v1987 = vadd.f32 %v1986, %v1965
        %v1988 = vadd.f32 %v1987, %v1967
        %v1989 = vadd.f32 %v1988, %v1969
        %v1990 = vadd.f32 %v1989, %v1971
        %v1991 = vadd.f32 %v1990, %v1973
        %v1992 = vadd.f32 %v1991, %v1975
        %v1993 = vadd.f32 %v1992, %v1977
        %v1994 = vrot.slane %v1993, 4
        %v1995 = vadd.f32 %v1993, %v1994
        %v1996 = vrot.slane %v1995, 2
        %v1997 = vadd.f32 %v1995, %v1996
        %v1998 = vrot.slane %v1997, 1
        %v1999 = vadd.f32 %v1997, %v1998
        %v2000 = vadd.f32 %v1948, %v1950
        %v2001 = vadd.f32 %v2000, %v1952
        %v2002 = vadd.f32 %v2001, %v1954
        %v2003 = vadd.f32 %v2002, %v1956
        %v2004 = vadd.f32 %v2003, %v1958
        %v2005 = vadd.f32 %v2004, %v1960
        %v2006 = vadd.f32 %v2005, %v1962
        %v2007 = vadd.f32 %v2006, %v1964
        %v2008 = vadd.f32 %v2007, %v1966
        %v2009 = vadd.f32 %v2008, %v1968
        %v2010 = vadd.f32 %v2009, %v1970
        %v2011 = vadd.f32 %v2010, %v1972
        %v2012 = vadd.f32 %v2011, %v1974
        %v2013 = vadd.f32 %v2012, %v1976
        %v2014 = vadd.f32 %v2013, %v1978
        %v2015 = vrot.slane %v2014, 4
        %v2016 = vadd.f32 %v2014, %v2015
        %v2017 = vrot.slane %v2016, 2
        %v2018 = vadd.f32 %v2016, %v2017
        %v2019 = vrot.slane %v2018, 1
        %v2020 = vadd.f32 %v2018, %v2019
        %v2021 = vxor.u32 %v1999, 2147483648
        %v2022 = vxor.u32 %v2020, 2147483648
        %v2023 = vmul.f32 %v2021, 1.442695
        %v2024 = vpow.pop %v2023
        %v2025 = vmul.f32 %v2022, 1.442695
        %v2026 = vpow.pop %v2025
        %v2027 = vadd.f32 %v2024, 1.0
        %v2028 = vadd.f32 %v2026, 1.0
        %v2029 = vrcp.pop %v2027
        %v2030 = vmul.f32 1.0, %v2029
        %v2031 = vrcp.pop %v2028
        %v2032 = vmul.f32 1.0, %v2031
        %v2033 = vsel %vm495, %v2030, 0.0
        %v2034 = vsel %vm495, %v2032, 0.0
        %v2035 = vadd.f32 %v2033, %v2034
        %2036 = vadd.xlane.f32.xlu0 %v2035
        %v2037 = vpop.xlane.xlu0 %2036
        %v2038 = vrot.slane %v2037, 4
        %v2039 = vadd.f32 %v2037, %v2038
        %v2040 = vrot.slane %v2039, 2
        %v2041 = vadd.f32 %v2039, %v2040
        %v2042 = vrot.slane %v2041, 1
        %v2043 = vadd.f32 %v2041, %v2042
        %s2044 = vtos %v2043
        %s2045 = smul.f32 %s2044, 0.00390625
        %v2046 = vlaneseq
        %v2047 = vshrl.u32 %v2046, 7
        %v2048 = vld [vmem:[%s9] sm:$0x3]
        %v2049 = vstv %s26
        %vm2050 = vcmp.eq.s32.totalorder %v2047, %v2049
        %v2051 = vstv %s2045
        %v2052 = vsel %vm2050, %v2051, 0.0
        %v2053 = vadd.f32 %v2048, %v2052
        %vm2054 = vcmask 1024
        %2055 = vst.msk [vmem:[%s9] sm:$0x3] %vm2054, %v2053
      $region72: #{tpu_custom_call.1} parent=55 // pred_fallthru
        _
      // Predicated region
      $region73: #{tpu_custom_call.1} parent=55 // pred_check
        %p2056 = pneg %p255
      $region74: #{tpu_custom_call.1} parent=55 // pred_check_branch
        %2058 = sbr.rel (%p2056) target = $region76
      $region75: #{tpu_custom_call.1} parent=55 // pred_region
        _
      $region76: #{tpu_custom_call.1} parent=55 // pred_fallthru
        _
      // Predicated region
      $region77: #{tpu_custom_call.1} parent=55 // pred_check
        %p2059 = pneg %p255
      $region78: #{tpu_custom_call.1} parent=55 // pred_check_branch
        %2061 = sbr.rel (%p2059) target = $region80
      $region79: #{tpu_custom_call.1} parent=55 // pred_region
        _
      $region80: #{tpu_custom_call.1} parent=55 // pred_fallthru
        _
    $region56: #{tpu_custom_call.1} parent=5 // pred_fallthru
      _
    %p2062 = scmp.le.s32.totalorder 2, %s15
    // Predicated region
    $region81: #{tpu_custom_call.1} parent=5 // pred_check
      %p2063 = pneg %p2062
    $region82: #{tpu_custom_call.1} parent=5 // pred_check_branch
      %2065 = sbr.rel (%p2063) target = $region84
    $region83: #{tpu_custom_call.1} parent=5 // pred_region
      %s2066 = ssub.s32 %s15, 2
    $region84: #{tpu_custom_call.1} parent=5 // pred_fallthru
      _
  $region6: #{tpu_custom_call.1} parent=0 // loop_footer
    %s19 = sadd.s32 1, %s15
  $region7: #{tpu_custom_call.1} parent=0 // loop_footer_branch
    %14 = sbr.rel target = $region3
  $region8: #{tpu_custom_call.1} parent=0 // loop_exit
    _

</llo_original>
